<compile_context>
chip_gen: v7x
topology: tpu7x:2x2x1
jax: 0.10.0
libtpu: 0.0.40
codegen_flags: <defaults>
</compile_context>

<pallas_src>
import functools

import numpy as np
import jax
import jax.numpy as jnp
from jax.experimental import pallas as pl
from jax.experimental.pallas import tpu as pltpu

EPS = 1e-5


# ----------------------------------------------------------------------------
# Constant-matrix builders (wrapper side; all tiny, computed once per shape).
# ----------------------------------------------------------------------------
def _banded_conv_weights(w, width):
    """Fold a 3x3 'same' conv into 3 banded matrices over the lane axis.

    Activation layout: rows = (n, h//2), lanes = ((h%2)*W + w)*C + c.
    Returns B of shape (3, 2*W*Ci, 2*W*Co); B[dho+1] multiplies the activation
    rows shifted by dho (pltpu.roll in the kernel).  The band structure encodes
    the kw taps and the 'same' zero padding along W; the (h%2, dho) bookkeeping
    encodes the kh taps.
    """
    ci, co = w.shape[2], w.shape[3]
    # sel_h[d, a, b, kh] = 1 iff input parity a at row-shift (d-1) feeds output
    # parity b through kernel row kh:  kh = 2*(d-1) + a - b + 1.
    d = np.arange(3)[:, None, None, None]
    a = np.arange(2)[None, :, None, None]
    b = np.arange(2)[None, None, :, None]
    kh = np.arange(3)[None, None, None, :]
    sel_h = (kh == 2 * (d - 1) + a - b + 1).astype(np.float32)
    # sel_w[i, o, kw] = 1 iff input column i feeds output column o through kernel
    # column kw (encodes 'same' zero padding along W):  i = o + kw - 1.
    i = np.arange(width)[:, None, None]
    o = np.arange(width)[None, :, None]
    kw = np.arange(3)[None, None, :]
    sel_w = (i == o + kw - 1).astype(np.float32)
    bmat = jnp.einsum('dabh,iow,hwce->daicboe',
                      jnp.asarray(sel_h), jnp.asarray(sel_w), w)
    return bmat.reshape(3, 2 * width * ci, 2 * width * co)


def _channel_mean_matrix(width, channels, count):
    """(2*W*C, 2*W*C) 0/1-over-count matrix: row-summed activations @ M gives the
    per-channel mean broadcast back onto every (h%2, w, c) lane."""
    lanes = np.arange(2 * width * channels)
    same = (lanes[:, None] % channels) == (lanes[None, :] % channels)
    return same.astype(np.float32) / float(count)


def _pool_matrix(width, channels):
    """(2*W*C, (W/2)*C) 0/1 matrix summing each 2x2 pool window (both h rows of a
    window live in the same lane row under the folded layout)."""
    half = width // 2
    src = np.arange(2 * width * channels)
    c = src % channels
    w = (src // channels) % width
    dst = (w // 2) * channels + c
    m = np.zeros((2 * width * channels, half * channels), np.float32)
    m[src, dst] = 1.0
    return m


# ----------------------------------------------------------------------------
# Fused kernel.
# ----------------------------------------------------------------------------
def conv_block_kernel(x_ref, b1_ref, b2_ref, m_ref, pw_ref, out_ref, *,
                      n_rows, half_h):
    """(conv3x3 -> BN -> ReLU) x2 -> avgpool2x2, everything resident in VMEM.

    Working layout (lane dense): rows = (n, h//2), lanes = (h%2, w, channel).
    """

    def shift_rows(x, dho):
        # result[r] = x[r + dho], with rows whose (h//2)+dho falls outside the
        # image zeroed (this is the H part of the 'same' zero padding).
        rolled = pltpu.roll(x, shift=(-dho) % n_rows, axis=0)
        ho = jax.lax.broadcasted_iota(jnp.int32, x.shape, 0) % half_h
        valid = (ho + dho >= 0) & (ho + dho < half_h)
        return jnp.where(valid, rolled, 0.0)

    def conv3x3(x_rows, b_ref):
        # One bf16 MXU matmul per row shift; the banded matrices encode the kw
        # taps, the W zero padding and the h-parity bookkeeping, so there is no
        # im2col (no slice/reshape/concat relayouts of the activation).
        acc = jnp.dot(x_rows.astype(jnp.bfloat16), b_ref[1],
                      preferred_element_type=jnp.float32)
        for dho in (-1, 1):
            xs = shift_rows(x_rows, dho).astype(jnp.bfloat16)
            acc = acc + jnp.dot(xs, b_ref[dho + 1],
                                preferred_element_type=jnp.float32)
        return acc

    def bn_relu(acc, pool_scale):
        # Training-mode BatchNorm (batch stats, biased var, gamma=1, beta=0),
        # two-pass in f32.  Per-channel reduce + broadcast over the (h%2, w)
        # lane groups is one f32 matmul against a constant 0/1 matrix, so no
        # lane<->sublane reshapes are needed.
        mean = jnp.dot(jnp.sum(acc, axis=0, keepdims=True), m_ref[...],
                       preferred_element_type=jnp.float32)
        centered = acc - mean
        var = jnp.dot(jnp.sum(centered * centered, axis=0, keepdims=True),
                      m_ref[...], preferred_element_type=jnp.float32)
        scale = jax.lax.rsqrt(var + EPS) * pool_scale
        return jnp.maximum(centered * scale, 0.0)

    x = x_ref[...]
    y1 = bn_relu(conv3x3(x, b1_ref), 1.0)
    # 0.25 avg-pool scale folded into the stage-2 BN scale (ReLU is positively
    # homogeneous and beta=0), so the pool below is a plain window sum.
    y2 = bn_relu(conv3x3(y1, b2_ref), 0.25)
    # 2x2 average pool: one lane-compacting matmul against a constant 0/1 matrix.
    # Output is (N*Ho, Wo*Cout) = 4 KB here; lane-128 output packing only matters
    # for large outputs and would cost a relayout at this size.
    out_ref[...] = jnp.dot(y2.astype(jnp.bfloat16), pw_ref[...],
                           preferred_element_type=jnp.float32).astype(out_ref.dtype)


# ----------------------------------------------------------------------------
# Wrapper.
# ----------------------------------------------------------------------------
def init_params(key, in_channels, out_channels):
    """Deterministic synthetic conv weights matching ConvBlock._init_weights.

    Conv biases are zero-initialized in the PyTorch module and exactly cancelled
    by the training-mode BatchNorm mean subtraction, so they are omitted.
    Weight layout: (kh, kw, Cin, Cout).
    """
    k1, k2 = jax.random.split(key)
    std1 = float(np.sqrt(2.0 / (in_channels * 9)))     # kaiming_normal_, fan_in
    std2 = float(np.sqrt(2.0 / (out_channels * 9)))
    w1 = jax.random.normal(k1, (3, 3, in_channels, out_channels), jnp.float32) * std1
    w2 = jax.random.normal(k2, (3, 3, out_channels, out_channels), jnp.float32) * std2
    return w1, w2


def conv_block_forward(x_nchw, params):
    w1, w2 = params
    N, Cin, H, W = x_nchw.shape
    Cout = w1.shape[-1]
    assert H % 2 == 0 and W % 2 == 0
    Ho, Wo = H // 2, W // 2

    # NCHW -> NHWC -> lane-dense slab; the reshape preserves row-major order
    # (rows = (n, h//2), lanes = (h%2, w, c)), so it is free.
    x2d = jnp.transpose(x_nchw, (0, 2, 3, 1)).reshape(N * Ho, 2 * W * Cin)

    b1 = _banded_conv_weights(w1, W).astype(jnp.bfloat16)      # (3, 2*W*Cin, 2*W*Cout)
    b2 = _banded_conv_weights(w2, W).astype(jnp.bfloat16)      # (3, 2*W*Cout, 2*W*Cout)
    m = jnp.asarray(_channel_mean_matrix(W, Cout, N * H * W))  # f32 (stats in f32)
    pw = jnp.asarray(_pool_matrix(W, Cout)).astype(jnp.bfloat16)

    kern = functools.partial(conv_block_kernel, n_rows=N * Ho, half_h=Ho)

    L1, L2 = 2 * W * Cin, 2 * W * Cout
    R = N * Ho
    flops = (2 * R * (3 * L1 * L2 + 3 * L2 * L2 + L2 * Wo * Cout)
             + 8 * L2 * L2 + 12 * R * L2)
    bytes_accessed = (4 * (x2d.size + m.size + R * Wo * Cout)
                      + 2 * (b1.size + b2.size + pw.size))

    y = pl.pallas_call(
        kern,
        out_shape=jax.ShapeDtypeStruct((N * Ho, Wo * Cout), jnp.float32),
        in_specs=[pl.BlockSpec(memory_space=pltpu.MemorySpace.VMEM)] * 5,
        out_specs=pl.BlockSpec(memory_space=pltpu.MemorySpace.VMEM),
        compiler_params=pltpu.CompilerParams(vmem_limit_bytes=32 * 1024 * 1024),
        cost_estimate=pl.CostEstimate(flops=flops, transcendentals=2 * L2,
                                      bytes_accessed=bytes_accessed),
    )(x2d, b1, b2, m, pw)

    y = y.reshape(N, Ho, Wo, Cout)                              # free row-major split
    return jnp.transpose(y, (0, 3, 1, 2))                       # NHWC -> NCHW


# ----------------------------------------------------------------------------
# Pure-JAX reference (identical semantics) and self-check.
# ----------------------------------------------------------------------------
def _reference(x_nchw, params):
    w1, w2 = params

    def conv(x, w):
        return jax.lax.conv_general_dilated(
            x, w, (1, 1), 'SAME', dimension_numbers=('NHWC', 'HWIO', 'NHWC'))

    def bn_relu(y):
        m = y.mean(axis=(0, 1, 2), keepdims=True)
        v = ((y - m) ** 2).mean(axis=(0, 1, 2), keepdims=True)
        return jnp.maximum((y - m) * jax.lax.rsqrt(v + EPS), 0.0)

    x = jnp.transpose(x_nchw, (0, 2, 3, 1))
    y = bn_relu(conv(x, w1))
    y = bn_relu(conv(y, w2))
    N, H, W, C = y.shape
    y = y.reshape(N, H // 2, 2, W // 2, 2, C).mean(axis=(2, 4))
    return jnp.transpose(y, (0, 3, 1, 2))


if __name__ == "__main__":
    key = jax.random.PRNGKey(0)
    kx, kp = jax.random.split(key)

    N, Cin, Cout, H, W = 2, 4, 8, 16, 16
    x = jax.random.normal(kx, (N, Cin, H, W), jnp.float32)      # NCHW, like PyTorch
    params = init_params(kp, Cin, Cout)

    out = jax.block_until_ready(conv_block_forward(x, params))
    ref = jax.block_until_ready(_reference(x, params))

    assert out.shape == (N, Cout, H // 2, W // 2)
    np.testing.assert_allclose(np.asarray(out), np.asarray(ref), atol=2e-2, rtol=2e-2)
    print("KERNEL_OK")
</pallas_src>

<mosaic_0001>
module attributes {stable_mosaic.version = 11 : i64} {
  func.func @conv_block_kernel(%arg0: memref<16x128xf32, #tpu.memory_space<vmem>>, %arg1: memref<3x128x256xbf16, #tpu.memory_space<vmem>>, %arg2: memref<3x256x256xbf16, #tpu.memory_space<vmem>>, %arg3: memref<256x256xf32, #tpu.memory_space<vmem>>, %arg4: memref<256x64xbf16, #tpu.memory_space<vmem>>, %arg5: memref<16x64xf32, #tpu.memory_space<vmem>>) attributes {dimension_semantics = [], scalar_prefetch = 0 : i64, scratch_operands = 0 : i64, tpu.core_type = #tpu.core_type<tc>} {
    %c0 = arith.constant 0 : index
    %c0_0 = arith.constant 0 : index
    %0 = vector.load %arg0[%c0, %c0_0] : memref<16x128xf32, #tpu.memory_space<vmem>>, vector<16x128xf32>
    %1 = arith.truncf %0 : vector<16x128xf32> to vector<16x128xbf16>
    %c1 = arith.constant 1 : index
    %c0_1 = arith.constant 0 : index
    %c0_2 = arith.constant 0 : index
    %2 = vector.load %arg1[%c1, %c0_1, %c0_2] : memref<3x128x256xbf16, #tpu.memory_space<vmem>>, vector<1x128x256xbf16>
    %3 = vector.shape_cast %2 : vector<1x128x256xbf16> to vector<128x256xbf16>
    %cst = arith.constant dense<0.000000e+00> : vector<16x256xf32>
    %4 = tpu.matmul %1, %3, %cst {dimension_numbers = #tpu.dot_dimension_numbers<[1], [0], [0], [1], [0, 0, 1, 1], [], []>} : vector<16x128xbf16>, vector<128x256xbf16>, vector<16x256xf32> -> vector<16x256xf32>
    %c1_i32 = arith.constant 1 : i32
    %5 = tpu.dynamic_rotate %0 by %c1_i32 dim 0 : vector<16x128xf32>, i32 -> vector<16x128xf32>
    %6 = tpu.iota {dimensions = array<i32: 0>} : vector<16x128xi32>
    %c8_i32 = arith.constant 8 : i32
    %c0_i32 = arith.constant 0 : i32
    %7 = arith.cmpi eq, %c8_i32, %c0_i32 : i32
    %c1_i32_3 = arith.constant 1 : i32
    %8 = arith.select %7, %c1_i32_3, %c8_i32 : i32
    %9 = vector.broadcast %8 : i32 to vector<16x128xi32>
    %10 = arith.remsi %6, %9 : vector<16x128xi32>
    %c0_i32_4 = arith.constant 0 : i32
    %11 = vector.broadcast %c0_i32_4 : i32 to vector<16x128xi32>
    %12 = arith.cmpi ne, %10, %11 : vector<16x128xi32>
    %c0_i32_5 = arith.constant 0 : i32
    %13 = vector.broadcast %c0_i32_5 : i32 to vector<16x128xi32>
    %14 = arith.cmpi slt, %10, %13 : vector<16x128xi32>
    %c0_i32_6 = arith.constant 0 : i32
    %15 = arith.cmpi slt, %8, %c0_i32_6 : i32
    %16 = vector.broadcast %15 : i1 to vector<16x128xi1>
    %17 = vector.broadcast %16 : vector<16x128xi1> to vector<16x128xi1>
    %18 = arith.xori %14, %17 : vector<16x128xi1>
    %19 = arith.andi %18, %12 : vector<16x128xi1>
    %20 = vector.broadcast %8 : i32 to vector<16x128xi32>
    %21 = arith.addi %10, %20 : vector<16x128xi32>
    %22 = arith.select %19, %21, %10 : vector<16x128xi1>, vector<16x128xi32>
    %c-1_i32 = arith.constant -1 : i32
    %23 = vector.broadcast %c-1_i32 : i32 to vector<16x128xi32>
    %24 = arith.addi %22, %23 : vector<16x128xi32>
    %c0_i32_7 = arith.constant 0 : i32
    %25 = vector.broadcast %c0_i32_7 : i32 to vector<16x128xi32>
    %26 = arith.cmpi sge, %24, %25 : vector<16x128xi32>
    %c-1_i32_8 = arith.constant -1 : i32
    %27 = vector.broadcast %c-1_i32_8 : i32 to vector<16x128xi32>
    %28 = arith.addi %22, %27 : vector<16x128xi32>
    %c8_i32_9 = arith.constant 8 : i32
    %29 = vector.broadcast %c8_i32_9 : i32 to vector<16x128xi32>
    %30 = arith.cmpi slt, %28, %29 : vector<16x128xi32>
    %31 = arith.andi %26, %30 : vector<16x128xi1>
    %cst_10 = arith.constant 0.000000e+00 : f32
    %32 = vector.broadcast %cst_10 : f32 to vector<16x128xf32>
    %33 = arith.select %31, %5, %32 : vector<16x128xi1>, vector<16x128xf32>
    %34 = arith.truncf %33 : vector<16x128xf32> to vector<16x128xbf16>
    %c0_11 = arith.constant 0 : index
    %c0_12 = arith.constant 0 : index
    %c0_13 = arith.constant 0 : index
    %35 = vector.load %arg1[%c0_11, %c0_12, %c0_13] : memref<3x128x256xbf16, #tpu.memory_space<vmem>>, vector<1x128x256xbf16>
    %36 = vector.shape_cast %35 : vector<1x128x256xbf16> to vector<128x256xbf16>
    %cst_14 = arith.constant dense<0.000000e+00> : vector<16x256xf32>
    %37 = tpu.matmul %34, %36, %cst_14 {dimension_numbers = #tpu.dot_dimension_numbers<[1], [0], [0], [1], [0, 0, 1, 1], [], []>} : vector<16x128xbf16>, vector<128x256xbf16>, vector<16x256xf32> -> vector<16x256xf32>
    %38 = arith.addf %4, %37 : vector<16x256xf32>
    %c15_i32 = arith.constant 15 : i32
    %39 = tpu.dynamic_rotate %0 by %c15_i32 dim 0 : vector<16x128xf32>, i32 -> vector<16x128xf32>
    %40 = tpu.iota {dimensions = array<i32: 0>} : vector<16x128xi32>
    %c8_i32_15 = arith.constant 8 : i32
    %c0_i32_16 = arith.constant 0 : i32
    %41 = arith.cmpi eq, %c8_i32_15, %c0_i32_16 : i32
    %c1_i32_17 = arith.constant 1 : i32
    %42 = arith.select %41, %c1_i32_17, %c8_i32_15 : i32
    %43 = vector.broadcast %42 : i32 to vector<16x128xi32>
    %44 = arith.remsi %40, %43 : vector<16x128xi32>
    %c0_i32_18 = arith.constant 0 : i32
    %45 = vector.broadcast %c0_i32_18 : i32 to vector<16x128xi32>
    %46 = arith.cmpi ne, %44, %45 : vector<16x128xi32>
    %c0_i32_19 = arith.constant 0 : i32
    %47 = vector.broadcast %c0_i32_19 : i32 to vector<16x128xi32>
    %48 = arith.cmpi slt, %44, %47 : vector<16x128xi32>
    %c0_i32_20 = arith.constant 0 : i32
    %49 = arith.cmpi slt, %42, %c0_i32_20 : i32
    %50 = vector.broadcast %49 : i1 to vector<16x128xi1>
    %51 = vector.broadcast %50 : vector<16x128xi1> to vector<16x128xi1>
    %52 = arith.xori %48, %51 : vector<16x128xi1>
    %53 = arith.andi %52, %46 : vector<16x128xi1>
    %54 = vector.broadcast %42 : i32 to vector<16x128xi32>
    %55 = arith.addi %44, %54 : vector<16x128xi32>
    %56 = arith.select %53, %55, %44 : vector<16x128xi1>, vector<16x128xi32>
    %c1_i32_21 = arith.constant 1 : i32
    %57 = vector.broadcast %c1_i32_21 : i32 to vector<16x128xi32>
    %58 = arith.addi %56, %57 : vector<16x128xi32>
    %c0_i32_22 = arith.constant 0 : i32
    %59 = vector.broadcast %c0_i32_22 : i32 to vector<16x128xi32>
    %60 = arith.cmpi sge, %58, %59 : vector<16x128xi32>
    %c1_i32_23 = arith.constant 1 : i32
    %61 = vector.broadcast %c1_i32_23 : i32 to vector<16x128xi32>
    %62 = arith.addi %56, %61 : vector<16x128xi32>
    %c8_i32_24 = arith.constant 8 : i32
    %63 = vector.broadcast %c8_i32_24 : i32 to vector<16x128xi32>
    %64 = arith.cmpi slt, %62, %63 : vector<16x128xi32>
    %65 = arith.andi %60, %64 : vector<16x128xi1>
    %cst_25 = arith.constant 0.000000e+00 : f32
    %66 = vector.broadcast %cst_25 : f32 to vector<16x128xf32>
    %67 = arith.select %65, %39, %66 : vector<16x128xi1>, vector<16x128xf32>
    %68 = arith.truncf %67 : vector<16x128xf32> to vector<16x128xbf16>
    %c2 = arith.constant 2 : index
    %c0_26 = arith.constant 0 : index
    %c0_27 = arith.constant 0 : index
    %69 = vector.load %arg1[%c2, %c0_26, %c0_27] : memref<3x128x256xbf16, #tpu.memory_space<vmem>>, vector<1x128x256xbf16>
    %70 = vector.shape_cast %69 : vector<1x128x256xbf16> to vector<128x256xbf16>
    %cst_28 = arith.constant dense<0.000000e+00> : vector<16x256xf32>
    %71 = tpu.matmul %68, %70, %cst_28 {dimension_numbers = #tpu.dot_dimension_numbers<[1], [0], [0], [1], [0, 0, 1, 1], [], []>} : vector<16x128xbf16>, vector<128x256xbf16>, vector<16x256xf32> -> vector<16x256xf32>
    %72 = arith.addf %38, %71 : vector<16x256xf32>
    %cst_29 = arith.constant dense<0.000000e+00> : vector<256xf32>
    %73 = vector.multi_reduction <add>, %72, %cst_29 [0] : vector<16x256xf32> to vector<256xf32>
    %74 = vector.shape_cast %73 : vector<256xf32> to vector<1x256xf32>
    %c0_30 = arith.constant 0 : index
    %c0_31 = arith.constant 0 : index
    %75 = vector.load %arg3[%c0_30, %c0_31] : memref<256x256xf32, #tpu.memory_space<vmem>>, vector<256x256xf32>
    %cst_32 = arith.constant dense<0.000000e+00> : vector<1x256xf32>
    %76 = tpu.matmul %74, %75, %cst_32 {dimension_numbers = #tpu.dot_dimension_numbers<[1], [0], [0], [1], [0, 0, 1, 1], [], []>} : vector<1x256xf32>, vector<256x256xf32>, vector<1x256xf32> -> vector<1x256xf32>
    %77 = vector.broadcast %76 : vector<1x256xf32> to vector<16x256xf32>
    %78 = arith.subf %72, %77 : vector<16x256xf32>
    %79 = arith.mulf %78, %78 : vector<16x256xf32>
    %cst_33 = arith.constant dense<0.000000e+00> : vector<256xf32>
    %80 = vector.multi_reduction <add>, %79, %cst_33 [0] : vector<16x256xf32> to vector<256xf32>
    %81 = vector.shape_cast %80 : vector<256xf32> to vector<1x256xf32>
    %c0_34 = arith.constant 0 : index
    %c0_35 = arith.constant 0 : index
    %82 = vector.load %arg3[%c0_34, %c0_35] : memref<256x256xf32, #tpu.memory_space<vmem>>, vector<256x256xf32>
    %cst_36 = arith.constant dense<0.000000e+00> : vector<1x256xf32>
    %83 = tpu.matmul %81, %82, %cst_36 {dimension_numbers = #tpu.dot_dimension_numbers<[1], [0], [0], [1], [0, 0, 1, 1], [], []>} : vector<1x256xf32>, vector<256x256xf32>, vector<1x256xf32> -> vector<1x256xf32>
    %cst_37 = arith.constant 9.99999974E-6 : f32
    %84 = vector.broadcast %cst_37 : f32 to vector<1x256xf32>
    %85 = arith.addf %83, %84 : vector<1x256xf32>
    %86 = math.rsqrt %85 : vector<1x256xf32>
    %cst_38 = arith.constant 1.000000e+00 : f32
    %87 = vector.broadcast %cst_38 : f32 to vector<1x256xf32>
    %88 = arith.mulf %86, %87 : vector<1x256xf32>
    %89 = vector.broadcast %88 : vector<1x256xf32> to vector<16x256xf32>
    %90 = arith.mulf %78, %89 : vector<16x256xf32>
    %cst_39 = arith.constant 0.000000e+00 : f32
    %91 = vector.broadcast %cst_39 : f32 to vector<16x256xf32>
    %92 = arith.maximumf %90, %91 : vector<16x256xf32>
    %93 = arith.truncf %92 : vector<16x256xf32> to vector<16x256xbf16>
    %c1_40 = arith.constant 1 : index
    %c0_41 = arith.constant 0 : index
    %c0_42 = arith.constant 0 : index
    %94 = vector.load %arg2[%c1_40, %c0_41, %c0_42] : memref<3x256x256xbf16, #tpu.memory_space<vmem>>, vector<1x256x256xbf16>
    %95 = vector.shape_cast %94 : vector<1x256x256xbf16> to vector<256x256xbf16>
    %cst_43 = arith.constant dense<0.000000e+00> : vector<16x256xf32>
    %96 = tpu.matmul %93, %95, %cst_43 {dimension_numbers = #tpu.dot_dimension_numbers<[1], [0], [0], [1], [0, 0, 1, 1], [], []>} : vector<16x256xbf16>, vector<256x256xbf16>, vector<16x256xf32> -> vector<16x256xf32>
    %c1_i32_44 = arith.constant 1 : i32
    %97 = tpu.dynamic_rotate %92 by %c1_i32_44 dim 0 : vector<16x256xf32>, i32 -> vector<16x256xf32>
    %98 = tpu.iota {dimensions = array<i32: 0>} : vector<16x256xi32>
    %c8_i32_45 = arith.constant 8 : i32
    %c0_i32_46 = arith.constant 0 : i32
    %99 = arith.cmpi eq, %c8_i32_45, %c0_i32_46 : i32
    %c1_i32_47 = arith.constant 1 : i32
    %100 = arith.select %99, %c1_i32_47, %c8_i32_45 : i32
    %101 = vector.broadcast %100 : i32 to vector<16x256xi32>
    %102 = arith.remsi %98, %101 : vector<16x256xi32>
    %c0_i32_48 = arith.constant 0 : i32
    %103 = vector.broadcast %c0_i32_48 : i32 to vector<16x256xi32>
    %104 = arith.cmpi ne, %102, %103 : vector<16x256xi32>
    %c0_i32_49 = arith.constant 0 : i32
    %105 = vector.broadcast %c0_i32_49 : i32 to vector<16x256xi32>
    %106 = arith.cmpi slt, %102, %105 : vector<16x256xi32>
    %c0_i32_50 = arith.constant 0 : i32
    %107 = arith.cmpi slt, %100, %c0_i32_50 : i32
    %108 = vector.broadcast %107 : i1 to vector<16x256xi1>
    %109 = vector.broadcast %108 : vector<16x256xi1> to vector<16x256xi1>
    %110 = arith.xori %106, %109 : vector<16x256xi1>
    %111 = arith.andi %110, %104 : vector<16x256xi1>
    %112 = vector.broadcast %100 : i32 to vector<16x256xi32>
    %113 = arith.addi %102, %112 : vector<16x256xi32>
    %114 = arith.select %111, %113, %102 : vector<16x256xi1>, vector<16x256xi32>
    %c-1_i32_51 = arith.constant -1 : i32
    %115 = vector.broadcast %c-1_i32_51 : i32 to vector<16x256xi32>
    %116 = arith.addi %114, %115 : vector<16x256xi32>
    %c0_i32_52 = arith.constant 0 : i32
    %117 = vector.broadcast %c0_i32_52 : i32 to vector<16x256xi32>
    %118 = arith.cmpi sge, %116, %117 : vector<16x256xi32>
    %c-1_i32_53 = arith.constant -1 : i32
    %119 = vector.broadcast %c-1_i32_53 : i32 to vector<16x256xi32>
    %120 = arith.addi %114, %119 : vector<16x256xi32>
    %c8_i32_54 = arith.constant 8 : i32
    %121 = vector.broadcast %c8_i32_54 : i32 to vector<16x256xi32>
    %122 = arith.cmpi slt, %120, %121 : vector<16x256xi32>
    %123 = arith.andi %118, %122 : vector<16x256xi1>
    %cst_55 = arith.constant 0.000000e+00 : f32
    %124 = vector.broadcast %cst_55 : f32 to vector<16x256xf32>
    %125 = arith.select %123, %97, %124 : vector<16x256xi1>, vector<16x256xf32>
    %126 = arith.truncf %125 : vector<16x256xf32> to vector<16x256xbf16>
    %c0_56 = arith.constant 0 : index
    %c0_57 = arith.constant 0 : index
    %c0_58 = arith.constant 0 : index
    %127 = vector.load %arg2[%c0_56, %c0_57, %c0_58] : memref<3x256x256xbf16, #tpu.memory_space<vmem>>, vector<1x256x256xbf16>
    %128 = vector.shape_cast %127 : vector<1x256x256xbf16> to vector<256x256xbf16>
    %cst_59 = arith.constant dense<0.000000e+00> : vector<16x256xf32>
    %129 = tpu.matmul %126, %128, %cst_59 {dimension_numbers = #tpu.dot_dimension_numbers<[1], [0], [0], [1], [0, 0, 1, 1], [], []>} : vector<16x256xbf16>, vector<256x256xbf16>, vector<16x256xf32> -> vector<16x256xf32>
    %130 = arith.addf %96, %129 : vector<16x256xf32>
    %c15_i32_60 = arith.constant 15 : i32
    %131 = tpu.dynamic_rotate %92 by %c15_i32_60 dim 0 : vector<16x256xf32>, i32 -> vector<16x256xf32>
    %132 = tpu.iota {dimensions = array<i32: 0>} : vector<16x256xi32>
    %c8_i32_61 = arith.constant 8 : i32
    %c0_i32_62 = arith.constant 0 : i32
    %133 = arith.cmpi eq, %c8_i32_61, %c0_i32_62 : i32
    %c1_i32_63 = arith.constant 1 : i32
    %134 = arith.select %133, %c1_i32_63, %c8_i32_61 : i32
    %135 = vector.broadcast %134 : i32 to vector<16x256xi32>
    %136 = arith.remsi %132, %135 : vector<16x256xi32>
    %c0_i32_64 = arith.constant 0 : i32
    %137 = vector.broadcast %c0_i32_64 : i32 to vector<16x256xi32>
    %138 = arith.cmpi ne, %136, %137 : vector<16x256xi32>
    %c0_i32_65 = arith.constant 0 : i32
    %139 = vector.broadcast %c0_i32_65 : i32 to vector<16x256xi32>
    %140 = arith.cmpi slt, %136, %139 : vector<16x256xi32>
    %c0_i32_66 = arith.constant 0 : i32
    %141 = arith.cmpi slt, %134, %c0_i32_66 : i32
    %142 = vector.broadcast %141 : i1 to vector<16x256xi1>
    %143 = vector.broadcast %142 : vector<16x256xi1> to vector<16x256xi1>
    %144 = arith.xori %140, %143 : vector<16x256xi1>
    %145 = arith.andi %144, %138 : vector<16x256xi1>
    %146 = vector.broadcast %134 : i32 to vector<16x256xi32>
    %147 = arith.addi %136, %146 : vector<16x256xi32>
    %148 = arith.select %145, %147, %136 : vector<16x256xi1>, vector<16x256xi32>
    %c1_i32_67 = arith.constant 1 : i32
    %149 = vector.broadcast %c1_i32_67 : i32 to vector<16x256xi32>
    %150 = arith.addi %148, %149 : vector<16x256xi32>
    %c0_i32_68 = arith.constant 0 : i32
    %151 = vector.broadcast %c0_i32_68 : i32 to vector<16x256xi32>
    %152 = arith.cmpi sge, %150, %151 : vector<16x256xi32>
    %c1_i32_69 = arith.constant 1 : i32
    %153 = vector.broadcast %c1_i32_69 : i32 to vector<16x256xi32>
    %154 = arith.addi %148, %153 : vector<16x256xi32>
    %c8_i32_70 = arith.constant 8 : i32
    %155 = vector.broadcast %c8_i32_70 : i32 to vector<16x256xi32>
    %156 = arith.cmpi slt, %154, %155 : vector<16x256xi32>
    %157 = arith.andi %152, %156 : vector<16x256xi1>
    %cst_71 = arith.constant 0.000000e+00 : f32
    %158 = vector.broadcast %cst_71 : f32 to vector<16x256xf32>
    %159 = arith.select %157, %131, %158 : vector<16x256xi1>, vector<16x256xf32>
    %160 = arith.truncf %159 : vector<16x256xf32> to vector<16x256xbf16>
    %c2_72 = arith.constant 2 : index
    %c0_73 = arith.constant 0 : index
    %c0_74 = arith.constant 0 : index
    %161 = vector.load %arg2[%c2_72, %c0_73, %c0_74] : memref<3x256x256xbf16, #tpu.memory_space<vmem>>, vector<1x256x256xbf16>
    %162 = vector.shape_cast %161 : vector<1x256x256xbf16> to vector<256x256xbf16>
    %cst_75 = arith.constant dense<0.000000e+00> : vector<16x256xf32>
    %163 = tpu.matmul %160, %162, %cst_75 {dimension_numbers = #tpu.dot_dimension_numbers<[1], [0], [0], [1], [0, 0, 1, 1], [], []>} : vector<16x256xbf16>, vector<256x256xbf16>, vector<16x256xf32> -> vector<16x256xf32>
    %164 = arith.addf %130, %163 : vector<16x256xf32>
    %cst_76 = arith.constant dense<0.000000e+00> : vector<256xf32>
    %165 = vector.multi_reduction <add>, %164, %cst_76 [0] : vector<16x256xf32> to vector<256xf32>
    %166 = vector.shape_cast %165 : vector<256xf32> to vector<1x256xf32>
    %c0_77 = arith.constant 0 : index
    %c0_78 = arith.constant 0 : index
    %167 = vector.load %arg3[%c0_77, %c0_78] : memref<256x256xf32, #tpu.memory_space<vmem>>, vector<256x256xf32>
    %cst_79 = arith.constant dense<0.000000e+00> : vector<1x256xf32>
    %168 = tpu.matmul %166, %167, %cst_79 {dimension_numbers = #tpu.dot_dimension_numbers<[1], [0], [0], [1], [0, 0, 1, 1], [], []>} : vector<1x256xf32>, vector<256x256xf32>, vector<1x256xf32> -> vector<1x256xf32>
    %169 = vector.broadcast %168 : vector<1x256xf32> to vector<16x256xf32>
    %170 = arith.subf %164, %169 : vector<16x256xf32>
    %171 = arith.mulf %170, %170 : vector<16x256xf32>
    %cst_80 = arith.constant dense<0.000000e+00> : vector<256xf32>
    %172 = vector.multi_reduction <add>, %171, %cst_80 [0] : vector<16x256xf32> to vector<256xf32>
    %173 = vector.shape_cast %172 : vector<256xf32> to vector<1x256xf32>
    %c0_81 = arith.constant 0 : index
    %c0_82 = arith.constant 0 : index
    %174 = vector.load %arg3[%c0_81, %c0_82] : memref<256x256xf32, #tpu.memory_space<vmem>>, vector<256x256xf32>
    %cst_83 = arith.constant dense<0.000000e+00> : vector<1x256xf32>
    %175 = tpu.matmul %173, %174, %cst_83 {dimension_numbers = #tpu.dot_dimension_numbers<[1], [0], [0], [1], [0, 0, 1, 1], [], []>} : vector<1x256xf32>, vector<256x256xf32>, vector<1x256xf32> -> vector<1x256xf32>
    %cst_84 = arith.constant 9.99999974E-6 : f32
    %176 = vector.broadcast %cst_84 : f32 to vector<1x256xf32>
    %177 = arith.addf %175, %176 : vector<1x256xf32>
    %178 = math.rsqrt %177 : vector<1x256xf32>
    %cst_85 = arith.constant 2.500000e-01 : f32
    %179 = vector.broadcast %cst_85 : f32 to vector<1x256xf32>
    %180 = arith.mulf %178, %179 : vector<1x256xf32>
    %181 = vector.broadcast %180 : vector<1x256xf32> to vector<16x256xf32>
    %182 = arith.mulf %170, %181 : vector<16x256xf32>
    %cst_86 = arith.constant 0.000000e+00 : f32
    %183 = vector.broadcast %cst_86 : f32 to vector<16x256xf32>
    %184 = arith.maximumf %182, %183 : vector<16x256xf32>
    %185 = arith.truncf %184 : vector<16x256xf32> to vector<16x256xbf16>
    %c0_87 = arith.constant 0 : index
    %c0_88 = arith.constant 0 : index
    %186 = vector.load %arg4[%c0_87, %c0_88] : memref<256x64xbf16, #tpu.memory_space<vmem>>, vector<256x64xbf16>
    %cst_89 = arith.constant dense<0.000000e+00> : vector<16x64xf32>
    %187 = tpu.matmul %185, %186, %cst_89 {dimension_numbers = #tpu.dot_dimension_numbers<[1], [0], [0], [1], [0, 0, 1, 1], [], []>} : vector<16x256xbf16>, vector<256x64xbf16>, vector<16x64xf32> -> vector<16x64xf32>
    %c0_90 = arith.constant 0 : index
    %c0_91 = arith.constant 0 : index
    %188 = vector.load %arg5[%c0_90, %c0_91] : memref<16x64xf32, #tpu.memory_space<vmem>>, vector<16x64xf32>
    tpu.vector_store %arg5[%c0_90, %c0_91], %187 {strides = array<i32>} : memref<16x64xf32, #tpu.memory_space<vmem>>, vector<16x64xf32>,
    return
  }
}

</mosaic_0001>

<llo_original>
// kernel: tpu_custom_call.1
$region0: #{tpu_custom_call.1}
  #allocation0 [shape = 'u32[]', space=smem, size = 0x4, offset = 0x4, fixed_abs, tag = 'smem constant byte address 0x4 - core index']
  #allocation1 [shape = 'u32[144,128]{1,0:T(1,128)}', space=vmem, size = 0x12000, scoped, tag = 'internal scratch']
  %s0 = inlined_call_operand.vmem [shape: f32[16,128], index: 0, kind: input, shape index: {}]
  %s1 = inlined_call_operand.hbm [shape: bf16[3,128,256], index: 1, kind: input, shape index: {}]
  %s2 = inlined_call_operand.hbm [shape: bf16[3,256,256], index: 2, kind: input, shape index: {}]
  %s3 = inlined_call_operand.hbm [shape: f32[256,256], index: 3, kind: input, shape index: {}]
  %s4 = inlined_call_operand.vmem [shape: bf16[256,64], index: 4, kind: input, shape index: {}]
  %s5 = inlined_call_operand.hbm [shape: f32[16,64], index: 5, kind: output, shape index: {}]
  %s6 = sld [smem:[#allocation0]]
  $region42: #{tpu_custom_call.1} parent=0
    _
  %s8 = ssub.s32 1, %s6
  %s9 = scalar_select 0, %s8, %s6
  $region1: #{tpu_custom_call.1} parent=0
    #allocation2 [shape = 'u8[196608]{0}', space=vmem, size = 0x30000, scoped, tag = 'input window, operand 1, single buffered']
    #allocation3 [shape = 's32[1]{0}', space=sflag, size = 0x4, scoped, tag = 'scoped memory for tpu_custom_call.1']
    #allocation4 [shape = 's32[1]{0}', space=sflag, size = 0x4, scoped, tag = 'scoped memory for tpu_custom_call.1']
    #allocation5 [shape = 'u8[393216]{0}', space=vmem, size = 0x60000, scoped, tag = 'input window, operand 2, single buffered']
    #allocation6 [shape = 's32[1]{0}', space=sflag, size = 0x4, scoped, tag = 'scoped memory for tpu_custom_call.1']
    #allocation7 [shape = 'u8[262144]{0}', space=vmem, size = 0x40000, scoped, tag = 'input window, operand 3, single buffered']
    #allocation8 [shape = 'u8[8192]{0}', space=vmem, size = 0x2000, scoped, tag = 'output window, operand 0, single buffered']
    %10 = vsyncpa [#allocation3], 0
    %11 = vsyncpa [#allocation6], 0
    %12 = vsyncpa [#allocation4], 0
    // Predicated region
    $region2: #{tpu_custom_call.1} parent=1 // pred_check
      _
    $region3: #{tpu_custom_call.1} parent=1 // pred_check_branch
      %14 = sbr.rel (0) target = $region5
    $region4: #{tpu_custom_call.1} parent=1 // pred_region
      _
    $region5: #{tpu_custom_call.1} parent=1 // pred_fallthru
      _
    // Predicated region
    $region6: #{tpu_custom_call.1} parent=1 // pred_check
      _
    $region7: #{tpu_custom_call.1} parent=1 // pred_check_branch
      %16 = sbr.rel (0) target = $region9
    $region8: #{tpu_custom_call.1} parent=1 // pred_region
      %s18 = ssub.s32 6144, 6144
      %19 = vsyncadd [#allocation3], %s18
      %s20 = sshll.u32 [#allocation2], 4
      %s21 = int_to_ptr.vmem [resolvable:$true] %s20
      %26 = dma.hbm_to_vmem [thread:$0]  %s1, 6144, %s21, [#allocation3], 128, 128, 8
    $region9: #{tpu_custom_call.1} parent=1 // pred_fallthru
      _
    // Predicated region
    $region10: #{tpu_custom_call.1} parent=1 // pred_check
      _
    $region11: #{tpu_custom_call.1} parent=1 // pred_check_branch
      %28 = sbr.rel (0) target = $region13
    $region12: #{tpu_custom_call.1} parent=1 // pred_region
      %s30 = ssub.s32 12288, 12288
      %31 = vsyncadd [#allocation6], %s30
      %s32 = sshll.u32 [#allocation5], 4
      %s33 = int_to_ptr.vmem [resolvable:$true] %s32
      %38 = dma.hbm_to_vmem [thread:$0]  %s2, 12288, %s33, [#allocation6], 128, 128, 8
    $region13: #{tpu_custom_call.1} parent=1 // pred_fallthru
      _
    // Predicated region
    $region14: #{tpu_custom_call.1} parent=1 // pred_check
      _
    $region15: #{tpu_custom_call.1} parent=1 // pred_check_branch
      %40 = sbr.rel (0) target = $region17
    $region16: #{tpu_custom_call.1} parent=1 // pred_region
      %s42 = ssub.s32 8192, 8192
      %43 = vsyncadd [#allocation6], %s42
      %s44 = sshll.u32 [#allocation7], 4
      %s45 = int_to_ptr.vmem [resolvable:$true] %s44
      %50 = dma.hbm_to_vmem [thread:$0]  %s3, 8192, %s45, [#allocation6], 256, 256, 16
    $region17: #{tpu_custom_call.1} parent=1 // pred_fallthru
      _
    // Predicated region
    $region18: #{tpu_custom_call.1} parent=1 // pred_check
      _
    $region19: #{tpu_custom_call.1} parent=1 // pred_check_branch
      %52 = sbr.rel (0) target = $region21
    $region20: #{tpu_custom_call.1} parent=1 // pred_region
      _
    $region21: #{tpu_custom_call.1} parent=1 // pred_fallthru
      _
    // Predicated region
    $region22: #{tpu_custom_call.1} parent=1 // pred_check
      _
    $region23: #{tpu_custom_call.1} parent=1 // pred_check_branch
      %54 = sbr.rel (0) target = $region25
    $region24: #{tpu_custom_call.1} parent=1 // pred_region
      %55 = dma.done [#allocation3], 6144
    $region25: #{tpu_custom_call.1} parent=1 // pred_fallthru
      _
    // Predicated region
    $region26: #{tpu_custom_call.1} parent=1 // pred_check
      _
    $region27: #{tpu_custom_call.1} parent=1 // pred_check_branch
      %57 = sbr.rel (0) target = $region29
    $region28: #{tpu_custom_call.1} parent=1 // pred_region
      %58 = dma.done [#allocation6], 12288
    $region29: #{tpu_custom_call.1} parent=1 // pred_fallthru
      _
    // Predicated region
    $region30: #{tpu_custom_call.1} parent=1 // pred_check
      _
    $region31: #{tpu_custom_call.1} parent=1 // pred_check_branch
      %60 = sbr.rel (0) target = $region33
    $region32: #{tpu_custom_call.1} parent=1 // pred_region
      %61 = dma.done [#allocation6], 8192
    $region33: #{tpu_custom_call.1} parent=1 // pred_fallthru
      _
    %v63 = vld [vmem:[%s0] sm:$0xff]
    %v64 = vld [vmem:[%s0 + $0x8] sm:$0xff]
    %v65 = vpack.c.bf16 %v64, %v63
    %s66 = scalar_lea.vmem [#allocation2], 128
    %v67 = vld [vmem:[%s66] sm:$0xff]
    %v68 = vld [vmem:[%s66 + $0x8] sm:$0xff]
    %v69 = vld [vmem:[%s66 + $0x10] sm:$0xff]
    %v70 = vld [vmem:[%s66 + $0x18] sm:$0xff]
    %v71 = vld [vmem:[%s66 + $0x20] sm:$0xff]
    %v72 = vld [vmem:[%s66 + $0x28] sm:$0xff]
    %v73 = vld [vmem:[%s66 + $0x30] sm:$0xff]
    %v74 = vld [vmem:[%s66 + $0x38] sm:$0xff]
    %v75 = vld [vmem:[%s66 + $0x40] sm:$0xff]
    %v76 = vld [vmem:[%s66 + $0x48] sm:$0xff]
    %v77 = vld [vmem:[%s66 + $0x50] sm:$0xff]
    %v78 = vld [vmem:[%s66 + $0x58] sm:$0xff]
    %v79 = vld [vmem:[%s66 + $0x60] sm:$0xff]
    %v80 = vld [vmem:[%s66 + $0x68] sm:$0xff]
    %v81 = vld [vmem:[%s66 + $0x70] sm:$0xff]
    %v82 = vld [vmem:[%s66 + $0x78] sm:$0xff]
    %v83 = vrot.slane %v63, 7
    %v84 = vrot.slane %v64, 7
    %v85 = vlaneseq
    %v86 = vshrl.u32 %v85, 7
    %vm87 = vcmp.lt.s32.totalorder %v86, 1
    %v88 = vsel %vm87, %v83, %v84
    %v89 = vsel %vm87, %v84, %v83
    %v90 = vadd.s32 %v86, 8
    %vm91 = vcmp.lt.s32.totalorder %v86, 0
    %v92 = vsub.s32 0, %v86
    %v93 = vsel %vm91, %v92, %v86
    %v94 = vshrl.u32 %v93, 3
    %v95 = vand.u32 %v93, 7
    %v96 = vsub.s32 0, %v95
    %v97 = vsel %vm91, %v96, %v95
    %vm98 = vcmp.lt.s32.totalorder %v90, 0
    %v99 = vsub.s32 0, %v90
    %v100 = vsel %vm98, %v99, %v90
    %v101 = vshrl.u32 %v100, 3
    %v102 = vand.u32 %v100, 7
    %v103 = vsub.s32 0, %v102
    %v104 = vsel %vm98, %v103, %v102
    %vm105 = vcmp.ne.s32.totalorder %v97, 0
    %vm106 = vcmp.ne.s32.totalorder %v104, 0
    %vm107 = vcmp.lt.s32.totalorder %v97, 0
    %vm108 = vcmp.lt.s32.totalorder %v104, 0
    %vm109 = vmand %vm107, %vm105
    %vm110 = vmand %vm108, %vm106
    %v111 = vadd.s32 %v97, 8
    %v112 = vadd.s32 %v104, 8
    %v113 = vsel %vm109, %v111, %v97
    %v114 = vsel %vm110, %v112, %v104
    %v115 = vadd.s32 %v113, 4294967295
    %v116 = vadd.s32 %v114, 4294967295
    %vm117 = vcmp.ge.s32.totalorder %v115, 0
    %vm118 = vcmp.ge.s32.totalorder %v116, 0
    %vm119 = vcmp.lt.s32.totalorder %v115, 8
    %vm120 = vcmp.lt.s32.totalorder %v116, 8
    %vm121 = vmand %vm117, %vm119
    %vm122 = vmand %vm118, %vm120
    %v123 = vsel %vm121, %v89, 0.0
    %v124 = vsel %vm122, %v88, 0.0
    %v125 = vpack.c.bf16 %v124, %v123
    %v126 = vld [vmem:[#allocation2] sm:$0xff]
    %v127 = vld [vmem:[#allocation2 + $0x8] sm:$0xff]
    %v128 = vld [vmem:[#allocation2 + $0x10] sm:$0xff]
    %v129 = vld [vmem:[#allocation2 + $0x18] sm:$0xff]
    %v130 = vld [vmem:[#allocation2 + $0x20] sm:$0xff]
    %v131 = vld [vmem:[#allocation2 + $0x28] sm:$0xff]
    %v132 = vld [vmem:[#allocation2 + $0x30] sm:$0xff]
    %v133 = vld [vmem:[#allocation2 + $0x38] sm:$0xff]
    %v134 = vld [vmem:[#allocation2 + $0x40] sm:$0xff]
    %v135 = vld [vmem:[#allocation2 + $0x48] sm:$0xff]
    %v136 = vld [vmem:[#allocation2 + $0x50] sm:$0xff]
    %v137 = vld [vmem:[#allocation2 + $0x58] sm:$0xff]
    %v138 = vld [vmem:[#allocation2 + $0x60] sm:$0xff]
    %v139 = vld [vmem:[#allocation2 + $0x68] sm:$0xff]
    %v140 = vld [vmem:[#allocation2 + $0x70] sm:$0xff]
    %v141 = vld [vmem:[#allocation2 + $0x78] sm:$0xff]
    %v158 = vunpack.c.l.b16 %v126
    %v159 = vunpack.c.h.b16 %v126
    %v160 = vunpack.c.l.b16 %v127
    %v161 = vunpack.c.h.b16 %v127
    %v162 = vunpack.c.l.b16 %v128
    %v163 = vunpack.c.h.b16 %v128
    %v164 = vunpack.c.l.b16 %v129
    %v165 = vunpack.c.h.b16 %v129
    %v166 = vunpack.c.l.b16 %v130
    %v167 = vunpack.c.h.b16 %v130
    %v168 = vunpack.c.l.b16 %v131
    %v169 = vunpack.c.h.b16 %v131
    %v170 = vunpack.c.l.b16 %v132
    %v171 = vunpack.c.h.b16 %v132
    %v172 = vunpack.c.l.b16 %v133
    %v173 = vunpack.c.h.b16 %v133
    %v174 = vunpack.c.l.b16 %v134
    %v175 = vunpack.c.h.b16 %v134
    %v176 = vunpack.c.l.b16 %v135
    %v177 = vunpack.c.h.b16 %v135
    %v178 = vunpack.c.l.b16 %v136
    %v179 = vunpack.c.h.b16 %v136
    %v180 = vunpack.c.l.b16 %v137
    %v181 = vunpack.c.h.b16 %v137
    %v182 = vunpack.c.l.b16 %v138
    %v183 = vunpack.c.h.b16 %v138
    %v184 = vunpack.c.l.b16 %v139
    %v185 = vunpack.c.h.b16 %v139
    %v186 = vunpack.c.l.b16 %v140
    %v187 = vunpack.c.h.b16 %v140
    %v188 = vunpack.c.l.b16 %v141
    %v189 = vunpack.c.h.b16 %v141
    %v190 = vpack.c.b16 %v160, %v158
    %v191 = vpack.c.b16 %v161, %v159
    %v192 = vpack.c.b16 %v164, %v162
    %v193 = vpack.c.b16 %v165, %v163
    %v194 = vpack.c.b16 %v168, %v166
    %v195 = vpack.c.b16 %v169, %v167
    %v196 = vpack.c.b16 %v172, %v170
    %v197 = vpack.c.b16 %v173, %v171
    %v198 = vpack.c.b16 %v176, %v174
    %v199 = vpack.c.b16 %v177, %v175
    %v200 = vpack.c.b16 %v180, %v178
    %v201 = vpack.c.b16 %v181, %v179
    %v202 = vpack.c.b16 %v184, %v182
    %v203 = vpack.c.b16 %v185, %v183
    %v204 = vpack.c.b16 %v188, %v186
    %v205 = vpack.c.b16 %v189, %v187
    %222 = vmatprep.subr.bf16.mxu0 %v191
    %223 = vmatpush1.bf16.msra.mxu0 %v190
    %224 = vmatprep.subr.bf16.mxu0 %v193
    %225 = vmatpush1.bf16.msra.mxu0 %v192
    %226 = vmatprep.subr.bf16.mxu0 %v195
    %227 = vmatpush1.bf16.msra.mxu0 %v194
    %228 = vmatprep.subr.bf16.mxu0 %v197
    %229 = vmatpush1.bf16.msra.mxu0 %v196
    %230 = vmatprep.subr.bf16.mxu0 %v199
    %231 = vmatpush1.bf16.msra.mxu0 %v198
    %232 = vmatprep.subr.bf16.mxu0 %v201
    %233 = vmatpush1.bf16.msra.mxu0 %v200
    %234 = vmatprep.subr.bf16.mxu0 %v203
    %235 = vmatpush1.bf16.msra.mxu0 %v202
    %236 = vmatprep.subr.bf16.mxu0 %v205
    %237 = vmatpush1.bf16.msra.mxu0 %v204
    %238 = vmatprep.subr.bf16.mxu0 0
    %239 = vmatpush1.bf16.msra.mxu0 0
    %240 = vmatprep.subr.bf16.mxu0 0
    %241 = vmatpush1.bf16.msra.mxu0 0
    %242 = vmatprep.subr.bf16.mxu0 0
    %243 = vmatpush1.bf16.msra.mxu0 0
    %244 = vmatprep.subr.bf16.mxu0 0
    %245 = vmatpush1.bf16.msra.mxu0 0
    %246 = vmatprep.subr.bf16.mxu0 0
    %247 = vmatpush1.bf16.msra.mxu0 0
    %248 = vmatprep.subr.bf16.mxu0 0
    %249 = vmatpush1.bf16.msra.mxu0 0
    %250 = vmatprep.subr.bf16.mxu0 0
    %251 = vmatpush1.bf16.msra.mxu0 0
    %252 = vmatprep.subr.bf16.mxu0 0
    %253 = vmatpush1.bf16.msra.mxu0 0
    %254 = vmatprep.mubr.bf16.mxu0 0
    %255 = vmatmul.mubr.bf16.gmra.mrb[0].mxu0 %v125
    %v256 = vpop.f32.mrb[0].mxu0
    %v257 = vadd.f32 0.0, %v256
    %v258 = vpop.f32.mrb[0].mxu0
    %v259 = vadd.f32 0.0, %v258
    %v260 = vpop.f32.mrb[0].mxu0
    %v261 = vadd.f32 0.0, %v260
    %v262 = vpop.f32.mrb[0].mxu0
    %v263 = vadd.f32 0.0, %v262
    %264 = vdwg.mxu0
    %v281 = vunpack.c.l.b16 %v67
    %v282 = vunpack.c.h.b16 %v67
    %v283 = vunpack.c.l.b16 %v68
    %v284 = vunpack.c.h.b16 %v68
    %v285 = vunpack.c.l.b16 %v69
    %v286 = vunpack.c.h.b16 %v69
    %v287 = vunpack.c.l.b16 %v70
    %v288 = vunpack.c.h.b16 %v70
    %v289 = vunpack.c.l.b16 %v71
    %v290 = vunpack.c.h.b16 %v71
    %v291 = vunpack.c.l.b16 %v72
    %v292 = vunpack.c.h.b16 %v72
    %v293 = vunpack.c.l.b16 %v73
    %v294 = vunpack.c.h.b16 %v73
    %v295 = vunpack.c.l.b16 %v74
    %v296 = vunpack.c.h.b16 %v74
    %v297 = vunpack.c.l.b16 %v75
    %v298 = vunpack.c.h.b16 %v75
    %v299 = vunpack.c.l.b16 %v76
    %v300 = vunpack.c.h.b16 %v76
    %v301 = vunpack.c.l.b16 %v77
    %v302 = vunpack.c.h.b16 %v77
    %v303 = vunpack.c.l.b16 %v78
    %v304 = vunpack.c.h.b16 %v78
    %v305 = vunpack.c.l.b16 %v79
    %v306 = vunpack.c.h.b16 %v79
    %v307 = vunpack.c.l.b16 %v80
    %v308 = vunpack.c.h.b16 %v80
    %v309 = vunpack.c.l.b16 %v81
    %v310 = vunpack.c.h.b16 %v81
    %v311 = vunpack.c.l.b16 %v82
    %v312 = vunpack.c.h.b16 %v82
    %v313 = vpack.c.b16 %v283, %v281
    %v314 = vpack.c.b16 %v284, %v282
    %v315 = vpack.c.b16 %v287, %v285
    %v316 = vpack.c.b16 %v288, %v286
    %v317 = vpack.c.b16 %v291, %v289
    %v318 = vpack.c.b16 %v292, %v290
    %v319 = vpack.c.b16 %v295, %v293
    %v320 = vpack.c.b16 %v296, %v294
    %v321 = vpack.c.b16 %v299, %v297
    %v322 = vpack.c.b16 %v300, %v298
    %v323 = vpack.c.b16 %v303, %v301
    %v324 = vpack.c.b16 %v304, %v302
    %v325 = vpack.c.b16 %v307, %v305
    %v326 = vpack.c.b16 %v308, %v306
    %v327 = vpack.c.b16 %v311, %v309
    %v328 = vpack.c.b16 %v312, %v310
    %345 = vmatprep.subr.bf16.mxu0 %v314
    %346 = vmatpush1.bf16.msra.mxu0 %v313
    %347 = vmatprep.subr.bf16.mxu0 %v316
    %348 = vmatpush1.bf16.msra.mxu0 %v315
    %349 = vmatprep.subr.bf16.mxu0 %v318
    %350 = vmatpush1.bf16.msra.mxu0 %v317
    %351 = vmatprep.subr.bf16.mxu0 %v320
    %352 = vmatpush1.bf16.msra.mxu0 %v319
    %353 = vmatprep.subr.bf16.mxu0 %v322
    %354 = vmatpush1.bf16.msra.mxu0 %v321
    %355 = vmatprep.subr.bf16.mxu0 %v324
    %356 = vmatpush1.bf16.msra.mxu0 %v323
    %357 = vmatprep.subr.bf16.mxu0 %v326
    %358 = vmatpush1.bf16.msra.mxu0 %v325
    %359 = vmatprep.subr.bf16.mxu0 %v328
    %360 = vmatpush1.bf16.msra.mxu0 %v327
    %361 = vmatprep.subr.bf16.mxu0 0
    %362 = vmatpush1.bf16.msra.mxu0 0
    %363 = vmatprep.subr.bf16.mxu0 0
    %364 = vmatpush1.bf16.msra.mxu0 0
    %365 = vmatprep.subr.bf16.mxu0 0
    %366 = vmatpush1.bf16.msra.mxu0 0
    %367 = vmatprep.subr.bf16.mxu0 0
    %368 = vmatpush1.bf16.msra.mxu0 0
    %369 = vmatprep.subr.bf16.mxu0 0
    %370 = vmatpush1.bf16.msra.mxu0 0
    %371 = vmatprep.subr.bf16.mxu0 0
    %372 = vmatpush1.bf16.msra.mxu0 0
    %373 = vmatprep.subr.bf16.mxu0 0
    %374 = vmatpush1.bf16.msra.mxu0 0
    %375 = vmatprep.subr.bf16.mxu0 0
    %376 = vmatpush1.bf16.msra.mxu0 0
    %377 = vmatprep.mubr.bf16.mxu0 0
    %378 = vmatmul.mubr.bf16.gmra.mrb[0].mxu0 %v65
    %v379 = vpop.f32.mrb[0].mxu0
    %v380 = vadd.f32 %v257, %v379
    %v381 = vpop.f32.mrb[0].mxu0
    %v382 = vadd.f32 %v259, %v381
    %v383 = vpop.f32.mrb[0].mxu0
    %v384 = vadd.f32 %v261, %v383
    %v385 = vpop.f32.mrb[0].mxu0
    %v386 = vadd.f32 %v263, %v385
    %387 = vdwg.mxu0
    %v388 = vrot.slane %v63, 1
    %v389 = vrot.slane %v64, 1
    %vm390 = vcmp.lt.s32.totalorder %v86, 7
    %v391 = vsel %vm390, %v388, %v389
    %v392 = vsel %vm390, %v389, %v388
    %v393 = vadd.s32 %v113, 1
    %v394 = vadd.s32 %v114, 1
    %vm395 = vcmp.ge.s32.totalorder %v393, 0
    %vm396 = vcmp.ge.s32.totalorder %v394, 0
    %vm397 = vcmp.lt.s32.totalorder %v393, 8
    %vm398 = vcmp.lt.s32.totalorder %v394, 8
    %vm399 = vmand %vm395, %vm397
    %vm400 = vmand %vm396, %vm398
    %v401 = vsel %vm399, %v391, 0.0
    %v402 = vsel %vm400, %v392, 0.0
    %v403 = vpack.c.bf16 %v402, %v401
    %s404 = scalar_lea.vmem [#allocation2], 256
    %v405 = vld [vmem:[%s404] sm:$0xff]
    %v406 = vld [vmem:[%s404 + $0x8] sm:$0xff]
    %v407 = vld [vmem:[%s404 + $0x10] sm:$0xff]
    %v408 = vld [vmem:[%s404 + $0x18] sm:$0xff]
    %v409 = vld [vmem:[%s404 + $0x20] sm:$0xff]
    %v410 = vld [vmem:[%s404 + $0x28] sm:$0xff]
    %v411 = vld [vmem:[%s404 + $0x30] sm:$0xff]
    %v412 = vld [vmem:[%s404 + $0x38] sm:$0xff]
    %v413 = vld [vmem:[%s404 + $0x40] sm:$0xff]
    %v414 = vld [vmem:[%s404 + $0x48] sm:$0xff]
    %v415 = vld [vmem:[%s404 + $0x50] sm:$0xff]
    %v416 = vld [vmem:[%s404 + $0x58] sm:$0xff]
    %v417 = vld [vmem:[%s404 + $0x60] sm:$0xff]
    %v418 = vld [vmem:[%s404 + $0x68] sm:$0xff]
    %v419 = vld [vmem:[%s404 + $0x70] sm:$0xff]
    %v420 = vld [vmem:[%s404 + $0x78] sm:$0xff]
    %v437 = vunpack.c.l.b16 %v405
    %v438 = vunpack.c.h.b16 %v405
    %v439 = vunpack.c.l.b16 %v406
    %v440 = vunpack.c.h.b16 %v406
    %v441 = vunpack.c.l.b16 %v407
    %v442 = vunpack.c.h.b16 %v407
    %v443 = vunpack.c.l.b16 %v408
    %v444 = vunpack.c.h.b16 %v408
    %v445 = vunpack.c.l.b16 %v409
    %v446 = vunpack.c.h.b16 %v409
    %v447 = vunpack.c.l.b16 %v410
    %v448 = vunpack.c.h.b16 %v410
    %v449 = vunpack.c.l.b16 %v411
    %v450 = vunpack.c.h.b16 %v411
    %v451 = vunpack.c.l.b16 %v412
    %v452 = vunpack.c.h.b16 %v412
    %v453 = vunpack.c.l.b16 %v413
    %v454 = vunpack.c.h.b16 %v413
    %v455 = vunpack.c.l.b16 %v414
    %v456 = vunpack.c.h.b16 %v414
    %v457 = vunpack.c.l.b16 %v415
    %v458 = vunpack.c.h.b16 %v415
    %v459 = vunpack.c.l.b16 %v416
    %v460 = vunpack.c.h.b16 %v416
    %v461 = vunpack.c.l.b16 %v417
    %v462 = vunpack.c.h.b16 %v417
    %v463 = vunpack.c.l.b16 %v418
    %v464 = vunpack.c.h.b16 %v418
    %v465 = vunpack.c.l.b16 %v419
    %v466 = vunpack.c.h.b16 %v419
    %v467 = vunpack.c.l.b16 %v420
    %v468 = vunpack.c.h.b16 %v420
    %v469 = vpack.c.b16 %v439, %v437
    %v470 = vpack.c.b16 %v440, %v438
    %v471 = vpack.c.b16 %v443, %v441
    %v472 = vpack.c.b16 %v444, %v442
    %v473 = vpack.c.b16 %v447, %v445
    %v474 = vpack.c.b16 %v448, %v446
    %v475 = vpack.c.b16 %v451, %v449
    %v476 = vpack.c.b16 %v452, %v450
    %v477 = vpack.c.b16 %v455, %v453
    %v478 = vpack.c.b16 %v456, %v454
    %v479 = vpack.c.b16 %v459, %v457
    %v480 = vpack.c.b16 %v460, %v458
    %v481 = vpack.c.b16 %v463, %v461
    %v482 = vpack.c.b16 %v464, %v462
    %v483 = vpack.c.b16 %v467, %v465
    %v484 = vpack.c.b16 %v468, %v466
    %501 = vmatprep.subr.bf16.mxu0 %v470
    %502 = vmatpush1.bf16.msra.mxu0 %v469
    %503 = vmatprep.subr.bf16.mxu0 %v472
    %504 = vmatpush1.bf16.msra.mxu0 %v471
    %505 = vmatprep.subr.bf16.mxu0 %v474
    %506 = vmatpush1.bf16.msra.mxu0 %v473
    %507 = vmatprep.subr.bf16.mxu0 %v476
    %508 = vmatpush1.bf16.msra.mxu0 %v475
    %509 = vmatprep.subr.bf16.mxu0 %v478
    %510 = vmatpush1.bf16.msra.mxu0 %v477
    %511 = vmatprep.subr.bf16.mxu0 %v480
    %512 = vmatpush1.bf16.msra.mxu0 %v479
    %513 = vmatprep.subr.bf16.mxu0 %v482
    %514 = vmatpush1.bf16.msra.mxu0 %v481
    %515 = vmatprep.subr.bf16.mxu0 %v484
    %516 = vmatpush1.bf16.msra.mxu0 %v483
    %517 = vmatprep.subr.bf16.mxu0 0
    %518 = vmatpush1.bf16.msra.mxu0 0
    %519 = vmatprep.subr.bf16.mxu0 0
    %520 = vmatpush1.bf16.msra.mxu0 0
    %521 = vmatprep.subr.bf16.mxu0 0
    %522 = vmatpush1.bf16.msra.mxu0 0
    %523 = vmatprep.subr.bf16.mxu0 0
    %524 = vmatpush1.bf16.msra.mxu0 0
    %525 = vmatprep.subr.bf16.mxu0 0
    %526 = vmatpush1.bf16.msra.mxu0 0
    %527 = vmatprep.subr.bf16.mxu0 0
    %528 = vmatpush1.bf16.msra.mxu0 0
    %529 = vmatprep.subr.bf16.mxu0 0
    %530 = vmatpush1.bf16.msra.mxu0 0
    %531 = vmatprep.subr.bf16.mxu0 0
    %532 = vmatpush1.bf16.msra.mxu0 0
    %533 = vmatprep.mubr.bf16.mxu0 0
    %534 = vmatmul.mubr.bf16.gmra.mrb[0].mxu0 %v403
    %v535 = vpop.f32.mrb[0].mxu0
    %v536 = vadd.f32 0.0, %v535
    %v537 = vpop.f32.mrb[0].mxu0
    %v538 = vadd.f32 0.0, %v537
    %v539 = vpop.f32.mrb[0].mxu0
    %v540 = vadd.f32 0.0, %v539
    %v541 = vpop.f32.mrb[0].mxu0
    %v542 = vadd.f32 0.0, %v541
    %543 = vdwg.mxu0
    %v544 = vadd.f32 %v380, %v536
    %v545 = vadd.f32 %v382, %v538
    %v546 = vadd.f32 %v384, %v540
    %v547 = vadd.f32 %v386, %v542
    %v548 = vadd.f32 %v544, %v546
    %v549 = vrot.slane %v548, 4
    %v550 = vadd.f32 %v548, %v549
    %v551 = vrot.slane %v550, 2
    %v552 = vadd.f32 %v550, %v551
    %v553 = vrot.slane %v552, 1
    %v554 = vadd.f32 %v552, %v553
    %v555 = vadd.f32 %v545, %v547
    %v556 = vrot.slane %v555, 4
    %v557 = vadd.f32 %v555, %v556
    %v558 = vrot.slane %v557, 2
    %v559 = vadd.f32 %v557, %v558
    %v560 = vrot.slane %v559, 1
    %v561 = vadd.f32 %v559, %v560
    %v562 = vld [vmem:[#allocation7] sm:$0xff]
    %v563 = vld [vmem:[#allocation7 + $0x8] sm:$0xff]
    %v564 = vld [vmem:[#allocation7 + $0x10] sm:$0xff]
    %v565 = vld [vmem:[#allocation7 + $0x18] sm:$0xff]
    %v566 = vld [vmem:[#allocation7 + $0x20] sm:$0xff]
    %v567 = vld [vmem:[#allocation7 + $0x28] sm:$0xff]
    %v568 = vld [vmem:[#allocation7 + $0x30] sm:$0xff]
    %v569 = vld [vmem:[#allocation7 + $0x38] sm:$0xff]
    %v570 = vld [vmem:[#allocation7 + $0x40] sm:$0xff]
    %v571 = vld [vmem:[#allocation7 + $0x48] sm:$0xff]
    %v572 = vld [vmem:[#allocation7 + $0x50] sm:$0xff]
    %v573 = vld [vmem:[#allocation7 + $0x58] sm:$0xff]
    %v574 = vld [vmem:[#allocation7 + $0x60] sm:$0xff]
    %v575 = vld [vmem:[#allocation7 + $0x68] sm:$0xff]
    %v576 = vld [vmem:[#allocation7 + $0x70] sm:$0xff]
    %v577 = vld [vmem:[#allocation7 + $0x78] sm:$0xff]
    %v578 = vld [vmem:[#allocation7 + $0x80] sm:$0xff]
    %v579 = vld [vmem:[#allocation7 + $0x88] sm:$0xff]
    %v580 = vld [vmem:[#allocation7 + $0x90] sm:$0xff]
    %v581 = vld [vmem:[#allocation7 + $0x98] sm:$0xff]
    %v582 = vld [vmem:[#allocation7 + $0xa0] sm:$0xff]
    %v583 = vld [vmem:[#allocation7 + $0xa8] sm:$0xff]
    %v584 = vld [vmem:[#allocation7 + $0xb0] sm:$0xff]
    %v585 = vld [vmem:[#allocation7 + $0xb8] sm:$0xff]
    %v586 = vld [vmem:[#allocation7 + $0xc0] sm:$0xff]
    %v587 = vld [vmem:[#allocation7 + $0xc8] sm:$0xff]
    %v588 = vld [vmem:[#allocation7 + $0xd0] sm:$0xff]
    %v589 = vld [vmem:[#allocation7 + $0xd8] sm:$0xff]
    %v590 = vld [vmem:[#allocation7 + $0xe0] sm:$0xff]
    %v591 = vld [vmem:[#allocation7 + $0xe8] sm:$0xff]
    %v592 = vld [vmem:[#allocation7 + $0xf0] sm:$0xff]
    %v593 = vld [vmem:[#allocation7 + $0xf8] sm:$0xff]
    %v594 = vld [vmem:[#allocation7 + $0x100] sm:$0xff]
    %v595 = vld [vmem:[#allocation7 + $0x108] sm:$0xff]
    %v596 = vld [vmem:[#allocation7 + $0x110] sm:$0xff]
    %v597 = vld [vmem:[#allocation7 + $0x118] sm:$0xff]
    %v598 = vld [vmem:[#allocation7 + $0x120] sm:$0xff]
    %v599 = vld [vmem:[#allocation7 + $0x128] sm:$0xff]
    %v600 = vld [vmem:[#allocation7 + $0x130] sm:$0xff]
    %v601 = vld [vmem:[#allocation7 + $0x138] sm:$0xff]
    %v602 = vld [vmem:[#allocation7 + $0x140] sm:$0xff]
    %v603 = vld [vmem:[#allocation7 + $0x148] sm:$0xff]
    %v604 = vld [vmem:[#allocation7 + $0x150] sm:$0xff]
    %v605 = vld [vmem:[#allocation7 + $0x158] sm:$0xff]
    %v606 = vld [vmem:[#allocation7 + $0x160] sm:$0xff]
    %v607 = vld [vmem:[#allocation7 + $0x168] sm:$0xff]
    %v608 = vld [vmem:[#allocation7 + $0x170] sm:$0xff]
    %v609 = vld [vmem:[#allocation7 + $0x178] sm:$0xff]
    %v610 = vld [vmem:[#allocation7 + $0x180] sm:$0xff]
    %v611 = vld [vmem:[#allocation7 + $0x188] sm:$0xff]
    %v612 = vld [vmem:[#allocation7 + $0x190] sm:$0xff]
    %v613 = vld [vmem:[#allocation7 + $0x198] sm:$0xff]
    %v614 = vld [vmem:[#allocation7 + $0x1a0] sm:$0xff]
    %v615 = vld [vmem:[#allocation7 + $0x1a8] sm:$0xff]
    %v616 = vld [vmem:[#allocation7 + $0x1b0] sm:$0xff]
    %v617 = vld [vmem:[#allocation7 + $0x1b8] sm:$0xff]
    %v618 = vld [vmem:[#allocation7 + $0x1c0] sm:$0xff]
    %v619 = vld [vmem:[#allocation7 + $0x1c8] sm:$0xff]
    %v620 = vld [vmem:[#allocation7 + $0x1d0] sm:$0xff]
    %v621 = vld [vmem:[#allocation7 + $0x1d8] sm:$0xff]
    %v622 = vld [vmem:[#allocation7 + $0x1e0] sm:$0xff]
    %v623 = vld [vmem:[#allocation7 + $0x1e8] sm:$0xff]
    %v624 = vld [vmem:[#allocation7 + $0x1f0] sm:$0xff]
    %v625 = vld [vmem:[#allocation7 + $0x1f8] sm:$0xff]
    %626 = vmatprep.subr.mxu0 %v563
    %627 = vmatpush1.msra.mxu0 %v562
    %628 = vmatprep.subr.mxu0 %v565
    %629 = vmatpush1.msra.mxu0 %v564
    %630 = vmatprep.subr.mxu0 %v567
    %631 = vmatpush1.msra.mxu0 %v566
    %632 = vmatprep.subr.mxu0 %v569
    %633 = vmatpush1.msra.mxu0 %v568
    %634 = vmatprep.subr.mxu0 %v571
    %635 = vmatpush1.msra.mxu0 %v570
    %636 = vmatprep.subr.mxu0 %v573
    %637 = vmatpush1.msra.mxu0 %v572
    %638 = vmatprep.subr.mxu0 %v575
    %639 = vmatpush1.msra.mxu0 %v574
    %640 = vmatprep.subr.mxu0 %v577
    %641 = vmatpush1.msra.mxu0 %v576
    %642 = vmatprep.subr.mxu0 %v579
    %643 = vmatpush1.msra.mxu0 %v578
    %644 = vmatprep.subr.mxu0 %v581
    %645 = vmatpush1.msra.mxu0 %v580
    %646 = vmatprep.subr.mxu0 %v583
    %647 = vmatpush1.msra.mxu0 %v582
    %648 = vmatprep.subr.mxu0 %v585
    %649 = vmatpush1.msra.mxu0 %v584
    %650 = vmatprep.subr.mxu0 %v587
    %651 = vmatpush1.msra.mxu0 %v586
    %652 = vmatprep.subr.mxu0 %v589
    %653 = vmatpush1.msra.mxu0 %v588
    %654 = vmatprep.subr.mxu0 %v591
    %655 = vmatpush1.msra.mxu0 %v590
    %656 = vmatprep.subr.mxu0 %v593
    %657 = vmatpush1.msra.mxu0 %v592
    %658 = vmatprep.subr.mxu0 %v595
    %659 = vmatpush1.msra.mxu0 %v594
    %660 = vmatprep.subr.mxu0 %v597
    %661 = vmatpush1.msra.mxu0 %v596
    %662 = vmatprep.subr.mxu0 %v599
    %663 = vmatpush1.msra.mxu0 %v598
    %664 = vmatprep.subr.mxu0 %v601
    %665 = vmatpush1.msra.mxu0 %v600
    %666 = vmatprep.subr.mxu0 %v603
    %667 = vmatpush1.msra.mxu0 %v602
    %668 = vmatprep.subr.mxu0 %v605
    %669 = vmatpush1.msra.mxu0 %v604
    %670 = vmatprep.subr.mxu0 %v607
    %671 = vmatpush1.msra.mxu0 %v606
    %672 = vmatprep.subr.mxu0 %v609
    %673 = vmatpush1.msra.mxu0 %v608
    %674 = vmatprep.subr.mxu0 %v611
    %675 = vmatpush1.msra.mxu0 %v610
    %676 = vmatprep.subr.mxu0 %v613
    %677 = vmatpush1.msra.mxu0 %v612
    %678 = vmatprep.subr.mxu0 %v615
    %679 = vmatpush1.msra.mxu0 %v614
    %680 = vmatprep.subr.mxu0 %v617
    %681 = vmatpush1.msra.mxu0 %v616
    %682 = vmatprep.subr.mxu0 %v619
    %683 = vmatpush1.msra.mxu0 %v618
    %684 = vmatprep.subr.mxu0 %v621
    %685 = vmatpush1.msra.mxu0 %v620
    %686 = vmatprep.subr.mxu0 %v623
    %687 = vmatpush1.msra.mxu0 %v622
    %688 = vmatprep.subr.mxu0 %v625
    %689 = vmatpush1.msra.mxu0 %v624
    %690 = vmatprep.mubr.f32.mxu0 %v561
    %691 = vmatmul.mubr.f32.gmra.mrb[0].mxu0 %v554
    %v692 = vpop.f32.mrb[0].mxu0
    %v693 = vadd.f32 0.0, %v692
    %v694 = vpop.f32.mrb[0].mxu0
    %v695 = vadd.f32 0.0, %v694
    %696 = vdwg.mxu0
    %v697 = vlaneseq
    %v698 = vshrl.u32 %v697, 7
    %v699 = vsub.s32 0, %v698
    %v700 = vrot.slane %v693, %v699
    %v701 = vlaneseq
    %v702 = vshrl.u32 %v701, 7
    %v703 = vsub.s32 0, %v702
    %v704 = vrot.slane %v695, %v703
    %v705 = vsub.f32 %v544, %v700
    %v706 = vsub.f32 %v545, %v704
    %v707 = vsub.f32 %v546, %v700
    %v708 = vsub.f32 %v547, %v704
    %v709 = vmul.f32 %v705, %v705
    %v710 = vmul.f32 %v706, %v706
    %v711 = vmul.f32 %v707, %v707
    %v712 = vmul.f32 %v708, %v708
    %v713 = vadd.f32 %v709, %v711
    %v714 = vrot.slane %v713, 4
    %v715 = vadd.f32 %v713, %v714
    %v716 = vrot.slane %v715, 2
    %v717 = vadd.f32 %v715, %v716
    %v718 = vrot.slane %v717, 1
    %v719 = vadd.f32 %v717, %v718
    %v720 = vadd.f32 %v710, %v712
    %v721 = vrot.slane %v720, 4
    %v722 = vadd.f32 %v720, %v721
    %v723 = vrot.slane %v722, 2
    %v724 = vadd.f32 %v722, %v723
    %v725 = vrot.slane %v724, 1
    %v726 = vadd.f32 %v724, %v725
    %727 = vmatprep.subr.mxu0 %v563
    %728 = vmatpush1.msra.mxu0 %v562
    %729 = vmatprep.subr.mxu0 %v565
    %730 = vmatpush1.msra.mxu0 %v564
    %731 = vmatprep.subr.mxu0 %v567
    %732 = vmatpush1.msra.mxu0 %v566
    %733 = vmatprep.subr.mxu0 %v569
    %734 = vmatpush1.msra.mxu0 %v568
    %735 = vmatprep.subr.mxu0 %v571
    %736 = vmatpush1.msra.mxu0 %v570
    %737 = vmatprep.subr.mxu0 %v573
    %738 = vmatpush1.msra.mxu0 %v572
    %739 = vmatprep.subr.mxu0 %v575
    %740 = vmatpush1.msra.mxu0 %v574
    %741 = vmatprep.subr.mxu0 %v577
    %742 = vmatpush1.msra.mxu0 %v576
    %743 = vmatprep.subr.mxu0 %v579
    %744 = vmatpush1.msra.mxu0 %v578
    %745 = vmatprep.subr.mxu0 %v581
    %746 = vmatpush1.msra.mxu0 %v580
    %747 = vmatprep.subr.mxu0 %v583
    %748 = vmatpush1.msra.mxu0 %v582
    %749 = vmatprep.subr.mxu0 %v585
    %750 = vmatpush1.msra.mxu0 %v584
    %751 = vmatprep.subr.mxu0 %v587
    %752 = vmatpush1.msra.mxu0 %v586
    %753 = vmatprep.subr.mxu0 %v589
    %754 = vmatpush1.msra.mxu0 %v588
    %755 = vmatprep.subr.mxu0 %v591
    %756 = vmatpush1.msra.mxu0 %v590
    %757 = vmatprep.subr.mxu0 %v593
    %758 = vmatpush1.msra.mxu0 %v592
    %759 = vmatprep.subr.mxu0 %v595
    %760 = vmatpush1.msra.mxu0 %v594
    %761 = vmatprep.subr.mxu0 %v597
    %762 = vmatpush1.msra.mxu0 %v596
    %763 = vmatprep.subr.mxu0 %v599
    %764 = vmatpush1.msra.mxu0 %v598
    %765 = vmatprep.subr.mxu0 %v601
    %766 = vmatpush1.msra.mxu0 %v600
    %767 = vmatprep.subr.mxu0 %v603
    %768 = vmatpush1.msra.mxu0 %v602
    %769 = vmatprep.subr.mxu0 %v605
    %770 = vmatpush1.msra.mxu0 %v604
    %771 = vmatprep.subr.mxu0 %v607
    %772 = vmatpush1.msra.mxu0 %v606
    %773 = vmatprep.subr.mxu0 %v609
    %774 = vmatpush1.msra.mxu0 %v608
    %775 = vmatprep.subr.mxu0 %v611
    %776 = vmatpush1.msra.mxu0 %v610
    %777 = vmatprep.subr.mxu0 %v613
    %778 = vmatpush1.msra.mxu0 %v612
    %779 = vmatprep.subr.mxu0 %v615
    %780 = vmatpush1.msra.mxu0 %v614
    %781 = vmatprep.subr.mxu0 %v617
    %782 = vmatpush1.msra.mxu0 %v616
    %783 = vmatprep.subr.mxu0 %v619
    %784 = vmatpush1.msra.mxu0 %v618
    %785 = vmatprep.subr.mxu0 %v621
    %786 = vmatpush1.msra.mxu0 %v620
    %787 = vmatprep.subr.mxu0 %v623
    %788 = vmatpush1.msra.mxu0 %v622
    %789 = vmatprep.subr.mxu0 %v625
    %790 = vmatpush1.msra.mxu0 %v624
    %791 = vmatprep.mubr.f32.mxu0 %v726
    %792 = vmatmul.mubr.f32.gmra.mrb[0].mxu0 %v719
    %v793 = vpop.f32.mrb[0].mxu0
    %v794 = vadd.f32 1e-05, %v793
    %v795 = vpop.f32.mrb[0].mxu0
    %v796 = vadd.f32 1e-05, %v795
    %797 = vdwg.mxu0
    %v798 = vrsqrt.pop %v794
    %v799 = vrsqrt.pop %v796
    %v800 = vlaneseq
    %v801 = vshrl.u32 %v800, 7
    %v802 = vsub.s32 0, %v801
    %v803 = vrot.slane %v798, %v802
    %v804 = vlaneseq
    %v805 = vshrl.u32 %v804, 7
    %v806 = vsub.s32 0, %v805
    %v807 = vrot.slane %v799, %v806
    %v808 = vmul.f32 %v705, %v803
    %v809 = vmul.f32 %v706, %v807
    %v810 = vmul.f32 %v707, %v803
    %v811 = vmul.f32 %v708, %v807
    %v812 = vmax.f32 %v808, 0.0
    %v813 = vmax.f32 %v809, 0.0
    %v814 = vmax.f32 %v810, 0.0
    %v815 = vmax.f32 %v811, 0.0
    %v816 = vpack.c.bf16 %v814, %v812
    %v817 = vpack.c.bf16 %v815, %v813
    %s818 = scalar_lea.vmem [#allocation5], 256
    %v819 = vld [vmem:[%s818] sm:$0xff]
    %v820 = vld [vmem:[%s818 + $0x8] sm:$0xff]
    %v821 = vld [vmem:[%s818 + $0x10] sm:$0xff]
    %v822 = vld [vmem:[%s818 + $0x18] sm:$0xff]
    %v823 = vld [vmem:[%s818 + $0x20] sm:$0xff]
    %v824 = vld [vmem:[%s818 + $0x28] sm:$0xff]
    %v825 = vld [vmem:[%s818 + $0x30] sm:$0xff]
    %v826 = vld [vmem:[%s818 + $0x38] sm:$0xff]
    %v827 = vld [vmem:[%s818 + $0x40] sm:$0xff]
    %v828 = vld [vmem:[%s818 + $0x48] sm:$0xff]
    %v829 = vld [vmem:[%s818 + $0x50] sm:$0xff]
    %v830 = vld [vmem:[%s818 + $0x58] sm:$0xff]
    %v831 = vld [vmem:[%s818 + $0x60] sm:$0xff]
    %v832 = vld [vmem:[%s818 + $0x68] sm:$0xff]
    %v833 = vld [vmem:[%s818 + $0x70] sm:$0xff]
    %v834 = vld [vmem:[%s818 + $0x78] sm:$0xff]
    %v835 = vld [vmem:[%s818 + $0x80] sm:$0xff]
    %v836 = vld [vmem:[%s818 + $0x88] sm:$0xff]
    %v837 = vld [vmem:[%s818 + $0x90] sm:$0xff]
    %v838 = vld [vmem:[%s818 + $0x98] sm:$0xff]
    %v839 = vld [vmem:[%s818 + $0xa0] sm:$0xff]
    %v840 = vld [vmem:[%s818 + $0xa8] sm:$0xff]
    %v841 = vld [vmem:[%s818 + $0xb0] sm:$0xff]
    %v842 = vld [vmem:[%s818 + $0xb8] sm:$0xff]
    %v843 = vld [vmem:[%s818 + $0xc0] sm:$0xff]
    %v844 = vld [vmem:[%s818 + $0xc8] sm:$0xff]
    %v845 = vld [vmem:[%s818 + $0xd0] sm:$0xff]
    %v846 = vld [vmem:[%s818 + $0xd8] sm:$0xff]
    %v847 = vld [vmem:[%s818 + $0xe0] sm:$0xff]
    %v848 = vld [vmem:[%s818 + $0xe8] sm:$0xff]
    %v849 = vld [vmem:[%s818 + $0xf0] sm:$0xff]
    %v850 = vld [vmem:[%s818 + $0xf8] sm:$0xff]
    %v851 = vrot.slane %v812, 7
    %v852 = vrot.slane %v813, 7
    %v853 = vrot.slane %v814, 7
    %v854 = vrot.slane %v815, 7
    %v855 = vsel %vm87, %v851, %v853
    %v856 = vsel %vm87, %v852, %v854
    %v857 = vsel %vm87, %v853, %v851
    %v858 = vsel %vm87, %v854, %v852
    %v859 = vsel %vm121, %v857, 0.0
    %v860 = vsel %vm121, %v858, 0.0
    %v861 = vsel %vm122, %v855, 0.0
    %v862 = vsel %vm122, %v856, 0.0
    %v863 = vpack.c.bf16 %v861, %v859
    %v864 = vpack.c.bf16 %v862, %v860
    %v865 = vld [vmem:[#allocation5] sm:$0xff]
    %v866 = vld [vmem:[#allocation5 + $0x8] sm:$0xff]
    %v867 = vld [vmem:[#allocation5 + $0x10] sm:$0xff]
    %v868 = vld [vmem:[#allocation5 + $0x18] sm:$0xff]
    %v869 = vld [vmem:[#allocation5 + $0x20] sm:$0xff]
    %v870 = vld [vmem:[#allocation5 + $0x28] sm:$0xff]
    %v871 = vld [vmem:[#allocation5 + $0x30] sm:$0xff]
    %v872 = vld [vmem:[#allocation5 + $0x38] sm:$0xff]
    %v873 = vld [vmem:[#allocation5 + $0x40] sm:$0xff]
    %v874 = vld [vmem:[#allocation5 + $0x48] sm:$0xff]
    %v875 = vld [vmem:[#allocation5 + $0x50] sm:$0xff]
    %v876 = vld [vmem:[#allocation5 + $0x58] sm:$0xff]
    %v877 = vld [vmem:[#allocation5 + $0x60] sm:$0xff]
    %v878 = vld [vmem:[#allocation5 + $0x68] sm:$0xff]
    %v879 = vld [vmem:[#allocation5 + $0x70] sm:$0xff]
    %v880 = vld [vmem:[#allocation5 + $0x78] sm:$0xff]
    %v881 = vld [vmem:[#allocation5 + $0x80] sm:$0xff]
    %v882 = vld [vmem:[#allocation5 + $0x88] sm:$0xff]
    %v883 = vld [vmem:[#allocation5 + $0x90] sm:$0xff]
    %v884 = vld [vmem:[#allocation5 + $0x98] sm:$0xff]
    %v885 = vld [vmem:[#allocation5 + $0xa0] sm:$0xff]
    %v886 = vld [vmem:[#allocation5 + $0xa8] sm:$0xff]
    %v887 = vld [vmem:[#allocation5 + $0xb0] sm:$0xff]
    %v888 = vld [vmem:[#allocation5 + $0xb8] sm:$0xff]
    %v889 = vld [vmem:[#allocation5 + $0xc0] sm:$0xff]
    %v890 = vld [vmem:[#allocation5 + $0xc8] sm:$0xff]
    %v891 = vld [vmem:[#allocation5 + $0xd0] sm:$0xff]
    %v892 = vld [vmem:[#allocation5 + $0xd8] sm:$0xff]
    %v893 = vld [vmem:[#allocation5 + $0xe0] sm:$0xff]
    %v894 = vld [vmem:[#allocation5 + $0xe8] sm:$0xff]
    %v895 = vld [vmem:[#allocation5 + $0xf0] sm:$0xff]
    %v896 = vld [vmem:[#allocation5 + $0xf8] sm:$0xff]
    %v929 = vunpack.c.l.b16 %v865
    %v930 = vunpack.c.h.b16 %v865
    %v931 = vunpack.c.l.b16 %v866
    %v932 = vunpack.c.h.b16 %v866
    %v933 = vunpack.c.l.b16 %v867
    %v934 = vunpack.c.h.b16 %v867
    %v935 = vunpack.c.l.b16 %v868
    %v936 = vunpack.c.h.b16 %v868
    %v937 = vunpack.c.l.b16 %v869
    %v938 = vunpack.c.h.b16 %v869
    %v939 = vunpack.c.l.b16 %v870
    %v940 = vunpack.c.h.b16 %v870
    %v941 = vunpack.c.l.b16 %v871
    %v942 = vunpack.c.h.b16 %v871
    %v943 = vunpack.c.l.b16 %v872
    %v944 = vunpack.c.h.b16 %v872
    %v945 = vunpack.c.l.b16 %v873
    %v946 = vunpack.c.h.b16 %v873
    %v947 = vunpack.c.l.b16 %v874
    %v948 = vunpack.c.h.b16 %v874
    %v949 = vunpack.c.l.b16 %v875
    %v950 = vunpack.c.h.b16 %v875
    %v951 = vunpack.c.l.b16 %v876
    %v952 = vunpack.c.h.b16 %v876
    %v953 = vunpack.c.l.b16 %v877
    %v954 = vunpack.c.h.b16 %v877
    %v955 = vunpack.c.l.b16 %v878
    %v956 = vunpack.c.h.b16 %v878
    %v957 = vunpack.c.l.b16 %v879
    %v958 = vunpack.c.h.b16 %v879
    %v959 = vunpack.c.l.b16 %v880
    %v960 = vunpack.c.h.b16 %v880
    %v961 = vunpack.c.l.b16 %v881
    %v962 = vunpack.c.h.b16 %v881
    %v963 = vunpack.c.l.b16 %v882
    %v964 = vunpack.c.h.b16 %v882
    %v965 = vunpack.c.l.b16 %v883
    %v966 = vunpack.c.h.b16 %v883
    %v967 = vunpack.c.l.b16 %v884
    %v968 = vunpack.c.h.b16 %v884
    %v969 = vunpack.c.l.b16 %v885
    %v970 = vunpack.c.h.b16 %v885
    %v971 = vunpack.c.l.b16 %v886
    %v972 = vunpack.c.h.b16 %v886
    %v973 = vunpack.c.l.b16 %v887
    %v974 = vunpack.c.h.b16 %v887
    %v975 = vunpack.c.l.b16 %v888
    %v976 = vunpack.c.h.b16 %v888
    %v977 = vunpack.c.l.b16 %v889
    %v978 = vunpack.c.h.b16 %v889
    %v979 = vunpack.c.l.b16 %v890
    %v980 = vunpack.c.h.b16 %v890
    %v981 = vunpack.c.l.b16 %v891
    %v982 = vunpack.c.h.b16 %v891
    %v983 = vunpack.c.l.b16 %v892
    %v984 = vunpack.c.h.b16 %v892
    %v985 = vunpack.c.l.b16 %v893
    %v986 = vunpack.c.h.b16 %v893
    %v987 = vunpack.c.l.b16 %v894
    %v988 = vunpack.c.h.b16 %v894
    %v989 = vunpack.c.l.b16 %v895
    %v990 = vunpack.c.h.b16 %v895
    %v991 = vunpack.c.l.b16 %v896
    %v992 = vunpack.c.h.b16 %v896
    %v993 = vpack.c.b16 %v931, %v929
    %v994 = vpack.c.b16 %v932, %v930
    %v995 = vpack.c.b16 %v935, %v933
    %v996 = vpack.c.b16 %v936, %v934
    %v997 = vpack.c.b16 %v939, %v937
    %v998 = vpack.c.b16 %v940, %v938
    %v999 = vpack.c.b16 %v943, %v941
    %v1000 = vpack.c.b16 %v944, %v942
    %v1001 = vpack.c.b16 %v947, %v945
    %v1002 = vpack.c.b16 %v948, %v946
    %v1003 = vpack.c.b16 %v951, %v949
    %v1004 = vpack.c.b16 %v952, %v950
    %v1005 = vpack.c.b16 %v955, %v953
    %v1006 = vpack.c.b16 %v956, %v954
    %v1007 = vpack.c.b16 %v959, %v957
    %v1008 = vpack.c.b16 %v960, %v958
    %v1009 = vpack.c.b16 %v963, %v961
    %v1010 = vpack.c.b16 %v964, %v962
    %v1011 = vpack.c.b16 %v967, %v965
    %v1012 = vpack.c.b16 %v968, %v966
    %v1013 = vpack.c.b16 %v971, %v969
    %v1014 = vpack.c.b16 %v972, %v970
    %v1015 = vpack.c.b16 %v975, %v973
    %v1016 = vpack.c.b16 %v976, %v974
    %v1017 = vpack.c.b16 %v979, %v977
    %v1018 = vpack.c.b16 %v980, %v978
    %v1019 = vpack.c.b16 %v983, %v981
    %v1020 = vpack.c.b16 %v984, %v982
    %v1021 = vpack.c.b16 %v987, %v985
    %v1022 = vpack.c.b16 %v988, %v986
    %v1023 = vpack.c.b16 %v991, %v989
    %v1024 = vpack.c.b16 %v992, %v990
    %1057 = vmatprep.subr.bf16.mxu0 %v994
    %1058 = vmatpush1.bf16.msra.mxu0 %v993
    %1059 = vmatprep.subr.bf16.mxu0 %v996
    %1060 = vmatpush1.bf16.msra.mxu0 %v995
    %1061 = vmatprep.subr.bf16.mxu0 %v998
    %1062 = vmatpush1.bf16.msra.mxu0 %v997
    %1063 = vmatprep.subr.bf16.mxu0 %v1000
    %1064 = vmatpush1.bf16.msra.mxu0 %v999
    %1065 = vmatprep.subr.bf16.mxu0 %v1002
    %1066 = vmatpush1.bf16.msra.mxu0 %v1001
    %1067 = vmatprep.subr.bf16.mxu0 %v1004
    %1068 = vmatpush1.bf16.msra.mxu0 %v1003
    %1069 = vmatprep.subr.bf16.mxu0 %v1006
    %1070 = vmatpush1.bf16.msra.mxu0 %v1005
    %1071 = vmatprep.subr.bf16.mxu0 %v1008
    %1072 = vmatpush1.bf16.msra.mxu0 %v1007
    %1073 = vmatprep.subr.bf16.mxu0 %v1010
    %1074 = vmatpush1.bf16.msra.mxu0 %v1009
    %1075 = vmatprep.subr.bf16.mxu0 %v1012
    %1076 = vmatpush1.bf16.msra.mxu0 %v1011
    %1077 = vmatprep.subr.bf16.mxu0 %v1014
    %1078 = vmatpush1.bf16.msra.mxu0 %v1013
    %1079 = vmatprep.subr.bf16.mxu0 %v1016
    %1080 = vmatpush1.bf16.msra.mxu0 %v1015
    %1081 = vmatprep.subr.bf16.mxu0 %v1018
    %1082 = vmatpush1.bf16.msra.mxu0 %v1017
    %1083 = vmatprep.subr.bf16.mxu0 %v1020
    %1084 = vmatpush1.bf16.msra.mxu0 %v1019
    %1085 = vmatprep.subr.bf16.mxu0 %v1022
    %1086 = vmatpush1.bf16.msra.mxu0 %v1021
    %1087 = vmatprep.subr.bf16.mxu0 %v1024
    %1088 = vmatpush1.bf16.msra.mxu0 %v1023
    %1089 = vmatprep.mubr.bf16.mxu0 %v864
    %1090 = vmatmul.mubr.bf16.gmra.mrb[0].mxu0 %v863
    %v1091 = vpop.f32.mrb[0].mxu0
    %v1092 = vadd.f32 0.0, %v1091
    %v1093 = vpop.f32.mrb[0].mxu0
    %v1094 = vadd.f32 0.0, %v1093
    %v1095 = vpop.f32.mrb[0].mxu0
    %v1096 = vadd.f32 0.0, %v1095
    %v1097 = vpop.f32.mrb[0].mxu0
    %v1098 = vadd.f32 0.0, %v1097
    %1099 = vdwg.mxu0
    %v1132 = vunpack.c.l.b16 %v819
    %v1133 = vunpack.c.h.b16 %v819
    %v1134 = vunpack.c.l.b16 %v820
    %v1135 = vunpack.c.h.b16 %v820
    %v1136 = vunpack.c.l.b16 %v821
    %v1137 = vunpack.c.h.b16 %v821
    %v1138 = vunpack.c.l.b16 %v822
    %v1139 = vunpack.c.h.b16 %v822
    %v1140 = vunpack.c.l.b16 %v823
    %v1141 = vunpack.c.h.b16 %v823
    %v1142 = vunpack.c.l.b16 %v824
    %v1143 = vunpack.c.h.b16 %v824
    %v1144 = vunpack.c.l.b16 %v825
    %v1145 = vunpack.c.h.b16 %v825
    %v1146 = vunpack.c.l.b16 %v826
    %v1147 = vunpack.c.h.b16 %v826
    %v1148 = vunpack.c.l.b16 %v827
    %v1149 = vunpack.c.h.b16 %v827
    %v1150 = vunpack.c.l.b16 %v828
    %v1151 = vunpack.c.h.b16 %v828
    %v1152 = vunpack.c.l.b16 %v829
    %v1153 = vunpack.c.h.b16 %v829
    %v1154 = vunpack.c.l.b16 %v830
    %v1155 = vunpack.c.h.b16 %v830
    %v1156 = vunpack.c.l.b16 %v831
    %v1157 = vunpack.c.h.b16 %v831
    %v1158 = vunpack.c.l.b16 %v832
    %v1159 = vunpack.c.h.b16 %v832
    %v1160 = vunpack.c.l.b16 %v833
    %v1161 = vunpack.c.h.b16 %v833
    %v1162 = vunpack.c.l.b16 %v834
    %v1163 = vunpack.c.h.b16 %v834
    %v1164 = vunpack.c.l.b16 %v835
    %v1165 = vunpack.c.h.b16 %v835
    %v1166 = vunpack.c.l.b16 %v836
    %v1167 = vunpack.c.h.b16 %v836
    %v1168 = vunpack.c.l.b16 %v837
    %v1169 = vunpack.c.h.b16 %v837
    %v1170 = vunpack.c.l.b16 %v838
    %v1171 = vunpack.c.h.b16 %v838
    %v1172 = vunpack.c.l.b16 %v839
    %v1173 = vunpack.c.h.b16 %v839
    %v1174 = vunpack.c.l.b16 %v840
    %v1175 = vunpack.c.h.b16 %v840
    %v1176 = vunpack.c.l.b16 %v841
    %v1177 = vunpack.c.h.b16 %v841
    %v1178 = vunpack.c.l.b16 %v842
    %v1179 = vunpack.c.h.b16 %v842
    %v1180 = vunpack.c.l.b16 %v843
    %v1181 = vunpack.c.h.b16 %v843
    %v1182 = vunpack.c.l.b16 %v844
    %v1183 = vunpack.c.h.b16 %v844
    %v1184 = vunpack.c.l.b16 %v845
    %v1185 = vunpack.c.h.b16 %v845
    %v1186 = vunpack.c.l.b16 %v846
    %v1187 = vunpack.c.h.b16 %v846
    %v1188 = vunpack.c.l.b16 %v847
    %v1189 = vunpack.c.h.b16 %v847
    %v1190 = vunpack.c.l.b16 %v848
    %v1191 = vunpack.c.h.b16 %v848
    %v1192 = vunpack.c.l.b16 %v849
    %v1193 = vunpack.c.h.b16 %v849
    %v1194 = vunpack.c.l.b16 %v850
    %v1195 = vunpack.c.h.b16 %v850
    %v1196 = vpack.c.b16 %v1134, %v1132
    %v1197 = vpack.c.b16 %v1135, %v1133
    %v1198 = vpack.c.b16 %v1138, %v1136
    %v1199 = vpack.c.b16 %v1139, %v1137
    %v1200 = vpack.c.b16 %v1142, %v1140
    %v1201 = vpack.c.b16 %v1143, %v1141
    %v1202 = vpack.c.b16 %v1146, %v1144
    %v1203 = vpack.c.b16 %v1147, %v1145
    %v1204 = vpack.c.b16 %v1150, %v1148
    %v1205 = vpack.c.b16 %v1151, %v1149
    %v1206 = vpack.c.b16 %v1154, %v1152
    %v1207 = vpack.c.b16 %v1155, %v1153
    %v1208 = vpack.c.b16 %v1158, %v1156
    %v1209 = vpack.c.b16 %v1159, %v1157
    %v1210 = vpack.c.b16 %v1162, %v1160
    %v1211 = vpack.c.b16 %v1163, %v1161
    %v1212 = vpack.c.b16 %v1166, %v1164
    %v1213 = vpack.c.b16 %v1167, %v1165
    %v1214 = vpack.c.b16 %v1170, %v1168
    %v1215 = vpack.c.b16 %v1171, %v1169
    %v1216 = vpack.c.b16 %v1174, %v1172
    %v1217 = vpack.c.b16 %v1175, %v1173
    %v1218 = vpack.c.b16 %v1178, %v1176
    %v1219 = vpack.c.b16 %v1179, %v1177
    %v1220 = vpack.c.b16 %v1182, %v1180
    %v1221 = vpack.c.b16 %v1183, %v1181
    %v1222 = vpack.c.b16 %v1186, %v1184
    %v1223 = vpack.c.b16 %v1187, %v1185
    %v1224 = vpack.c.b16 %v1190, %v1188
    %v1225 = vpack.c.b16 %v1191, %v1189
    %v1226 = vpack.c.b16 %v1194, %v1192
    %v1227 = vpack.c.b16 %v1195, %v1193
    %1260 = vmatprep.subr.bf16.mxu0 %v1197
    %1261 = vmatpush1.bf16.msra.mxu0 %v1196
    %1262 = vmatprep.subr.bf16.mxu0 %v1199
    %1263 = vmatpush1.bf16.msra.mxu0 %v1198
    %1264 = vmatprep.subr.bf16.mxu0 %v1201
    %1265 = vmatpush1.bf16.msra.mxu0 %v1200
    %1266 = vmatprep.subr.bf16.mxu0 %v1203
    %1267 = vmatpush1.bf16.msra.mxu0 %v1202
    %1268 = vmatprep.subr.bf16.mxu0 %v1205
    %1269 = vmatpush1.bf16.msra.mxu0 %v1204
    %1270 = vmatprep.subr.bf16.mxu0 %v1207
    %1271 = vmatpush1.bf16.msra.mxu0 %v1206
    %1272 = vmatprep.subr.bf16.mxu0 %v1209
    %1273 = vmatpush1.bf16.msra.mxu0 %v1208
    %1274 = vmatprep.subr.bf16.mxu0 %v1211
    %1275 = vmatpush1.bf16.msra.mxu0 %v1210
    %1276 = vmatprep.subr.bf16.mxu0 %v1213
    %1277 = vmatpush1.bf16.msra.mxu0 %v1212
    %1278 = vmatprep.subr.bf16.mxu0 %v1215
    %1279 = vmatpush1.bf16.msra.mxu0 %v1214
    %1280 = vmatprep.subr.bf16.mxu0 %v1217
    %1281 = vmatpush1.bf16.msra.mxu0 %v1216
    %1282 = vmatprep.subr.bf16.mxu0 %v1219
    %1283 = vmatpush1.bf16.msra.mxu0 %v1218
    %1284 = vmatprep.subr.bf16.mxu0 %v1221
    %1285 = vmatpush1.bf16.msra.mxu0 %v1220
    %1286 = vmatprep.subr.bf16.mxu0 %v1223
    %1287 = vmatpush1.bf16.msra.mxu0 %v1222
    %1288 = vmatprep.subr.bf16.mxu0 %v1225
    %1289 = vmatpush1.bf16.msra.mxu0 %v1224
    %1290 = vmatprep.subr.bf16.mxu0 %v1227
    %1291 = vmatpush1.bf16.msra.mxu0 %v1226
    %1292 = vmatprep.mubr.bf16.mxu0 %v817
    %1293 = vmatmul.mubr.bf16.gmra.mrb[0].mxu0 %v816
    %v1294 = vpop.f32.mrb[0].mxu0
    %v1295 = vadd.f32 %v1092, %v1294
    %v1296 = vpop.f32.mrb[0].mxu0
    %v1297 = vadd.f32 %v1094, %v1296
    %v1298 = vpop.f32.mrb[0].mxu0
    %v1299 = vadd.f32 %v1096, %v1298
    %v1300 = vpop.f32.mrb[0].mxu0
    %v1301 = vadd.f32 %v1098, %v1300
    %1302 = vdwg.mxu0
    %v1303 = vrot.slane %v812, 1
    %v1304 = vrot.slane %v813, 1
    %v1305 = vrot.slane %v814, 1
    %v1306 = vrot.slane %v815, 1
    %v1307 = vsel %vm390, %v1303, %v1305
    %v1308 = vsel %vm390, %v1304, %v1306
    %v1309 = vsel %vm390, %v1305, %v1303
    %v1310 = vsel %vm390, %v1306, %v1304
    %v1311 = vsel %vm399, %v1307, 0.0
    %v1312 = vsel %vm399, %v1308, 0.0
    %v1313 = vsel %vm400, %v1309, 0.0
    %v1314 = vsel %vm400, %v1310, 0.0
    %v1315 = vpack.c.bf16 %v1313, %v1311
    %v1316 = vpack.c.bf16 %v1314, %v1312
    %s1317 = scalar_lea.vmem [#allocation5], 512
    %v1318 = vld [vmem:[%s1317] sm:$0xff]
    %v1319 = vld [vmem:[%s1317 + $0x8] sm:$0xff]
    %v1320 = vld [vmem:[%s1317 + $0x10] sm:$0xff]
    %v1321 = vld [vmem:[%s1317 + $0x18] sm:$0xff]
    %v1322 = vld [vmem:[%s1317 + $0x20] sm:$0xff]
    %v1323 = vld [vmem:[%s1317 + $0x28] sm:$0xff]
    %v1324 = vld [vmem:[%s1317 + $0x30] sm:$0xff]
    %v1325 = vld [vmem:[%s1317 + $0x38] sm:$0xff]
    %v1326 = vld [vmem:[%s1317 + $0x40] sm:$0xff]
    %v1327 = vld [vmem:[%s1317 + $0x48] sm:$0xff]
    %v1328 = vld [vmem:[%s1317 + $0x50] sm:$0xff]
    %v1329 = vld [vmem:[%s1317 + $0x58] sm:$0xff]
    %v1330 = vld [vmem:[%s1317 + $0x60] sm:$0xff]
    %v1331 = vld [vmem:[%s1317 + $0x68] sm:$0xff]
    %v1332 = vld [vmem:[%s1317 + $0x70] sm:$0xff]
    %v1333 = vld [vmem:[%s1317 + $0x78] sm:$0xff]
    %v1334 = vld [vmem:[%s1317 + $0x80] sm:$0xff]
    %v1335 = vld [vmem:[%s1317 + $0x88] sm:$0xff]
    %v1336 = vld [vmem:[%s1317 + $0x90] sm:$0xff]
    %v1337 = vld [vmem:[%s1317 + $0x98] sm:$0xff]
    %v1338 = vld [vmem:[%s1317 + $0xa0] sm:$0xff]
    %v1339 = vld [vmem:[%s1317 + $0xa8] sm:$0xff]
    %v1340 = vld [vmem:[%s1317 + $0xb0] sm:$0xff]
    %v1341 = vld [vmem:[%s1317 + $0xb8] sm:$0xff]
    %v1342 = vld [vmem:[%s1317 + $0xc0] sm:$0xff]
    %v1343 = vld [vmem:[%s1317 + $0xc8] sm:$0xff]
    %v1344 = vld [vmem:[%s1317 + $0xd0] sm:$0xff]
    %v1345 = vld [vmem:[%s1317 + $0xd8] sm:$0xff]
    %v1346 = vld [vmem:[%s1317 + $0xe0] sm:$0xff]
    %v1347 = vld [vmem:[%s1317 + $0xe8] sm:$0xff]
    %v1348 = vld [vmem:[%s1317 + $0xf0] sm:$0xff]
    %v1349 = vld [vmem:[%s1317 + $0xf8] sm:$0xff]
    %v1382 = vunpack.c.l.b16 %v1318
    %v1383 = vunpack.c.h.b16 %v1318
    %v1384 = vunpack.c.l.b16 %v1319
    %v1385 = vunpack.c.h.b16 %v1319
    %v1386 = vunpack.c.l.b16 %v1320
    %v1387 = vunpack.c.h.b16 %v1320
    %v1388 = vunpack.c.l.b16 %v1321
    %v1389 = vunpack.c.h.b16 %v1321
    %v1390 = vunpack.c.l.b16 %v1322
    %v1391 = vunpack.c.h.b16 %v1322
    %v1392 = vunpack.c.l.b16 %v1323
    %v1393 = vunpack.c.h.b16 %v1323
    %v1394 = vunpack.c.l.b16 %v1324
    %v1395 = vunpack.c.h.b16 %v1324
    %v1396 = vunpack.c.l.b16 %v1325
    %v1397 = vunpack.c.h.b16 %v1325
    %v1398 = vunpack.c.l.b16 %v1326
    %v1399 = vunpack.c.h.b16 %v1326
    %v1400 = vunpack.c.l.b16 %v1327
    %v1401 = vunpack.c.h.b16 %v1327
    %v1402 = vunpack.c.l.b16 %v1328
    %v1403 = vunpack.c.h.b16 %v1328
    %v1404 = vunpack.c.l.b16 %v1329
    %v1405 = vunpack.c.h.b16 %v1329
    %v1406 = vunpack.c.l.b16 %v1330
    %v1407 = vunpack.c.h.b16 %v1330
    %v1408 = vunpack.c.l.b16 %v1331
    %v1409 = vunpack.c.h.b16 %v1331
    %v1410 = vunpack.c.l.b16 %v1332
    %v1411 = vunpack.c.h.b16 %v1332
    %v1412 = vunpack.c.l.b16 %v1333
    %v1413 = vunpack.c.h.b16 %v1333
    %v1414 = vunpack.c.l.b16 %v1334
    %v1415 = vunpack.c.h.b16 %v1334
    %v1416 = vunpack.c.l.b16 %v1335
    %v1417 = vunpack.c.h.b16 %v1335
    %v1418 = vunpack.c.l.b16 %v1336
    %v1419 = vunpack.c.h.b16 %v1336
    %v1420 = vunpack.c.l.b16 %v1337
    %v1421 = vunpack.c.h.b16 %v1337
    %v1422 = vunpack.c.l.b16 %v1338
    %v1423 = vunpack.c.h.b16 %v1338
    %v1424 = vunpack.c.l.b16 %v1339
    %v1425 = vunpack.c.h.b16 %v1339
    %v1426 = vunpack.c.l.b16 %v1340
    %v1427 = vunpack.c.h.b16 %v1340
    %v1428 = vunpack.c.l.b16 %v1341
    %v1429 = vunpack.c.h.b16 %v1341
    %v1430 = vunpack.c.l.b16 %v1342
    %v1431 = vunpack.c.h.b16 %v1342
    %v1432 = vunpack.c.l.b16 %v1343
    %v1433 = vunpack.c.h.b16 %v1343
    %v1434 = vunpack.c.l.b16 %v1344
    %v1435 = vunpack.c.h.b16 %v1344
    %v1436 = vunpack.c.l.b16 %v1345
    %v1437 = vunpack.c.h.b16 %v1345
    %v1438 = vunpack.c.l.b16 %v1346
    %v1439 = vunpack.c.h.b16 %v1346
    %v1440 = vunpack.c.l.b16 %v1347
    %v1441 = vunpack.c.h.b16 %v1347
    %v1442 = vunpack.c.l.b16 %v1348
    %v1443 = vunpack.c.h.b16 %v1348
    %v1444 = vunpack.c.l.b16 %v1349
    %v1445 = vunpack.c.h.b16 %v1349
    %v1446 = vpack.c.b16 %v1384, %v1382
    %v1447 = vpack.c.b16 %v1385, %v1383
    %v1448 = vpack.c.b16 %v1388, %v1386
    %v1449 = vpack.c.b16 %v1389, %v1387
    %v1450 = vpack.c.b16 %v1392, %v1390
    %v1451 = vpack.c.b16 %v1393, %v1391
    %v1452 = vpack.c.b16 %v1396, %v1394
    %v1453 = vpack.c.b16 %v1397, %v1395
    %v1454 = vpack.c.b16 %v1400, %v1398
    %v1455 = vpack.c.b16 %v1401, %v1399
    %v1456 = vpack.c.b16 %v1404, %v1402
    %v1457 = vpack.c.b16 %v1405, %v1403
    %v1458 = vpack.c.b16 %v1408, %v1406
    %v1459 = vpack.c.b16 %v1409, %v1407
    %v1460 = vpack.c.b16 %v1412, %v1410
    %v1461 = vpack.c.b16 %v1413, %v1411
    %v1462 = vpack.c.b16 %v1416, %v1414
    %v1463 = vpack.c.b16 %v1417, %v1415
    %v1464 = vpack.c.b16 %v1420, %v1418
    %v1465 = vpack.c.b16 %v1421, %v1419
    %v1466 = vpack.c.b16 %v1424, %v1422
    %v1467 = vpack.c.b16 %v1425, %v1423
    %v1468 = vpack.c.b16 %v1428, %v1426
    %v1469 = vpack.c.b16 %v1429, %v1427
    %v1470 = vpack.c.b16 %v1432, %v1430
    %v1471 = vpack.c.b16 %v1433, %v1431
    %v1472 = vpack.c.b16 %v1436, %v1434
    %v1473 = vpack.c.b16 %v1437, %v1435
    %v1474 = vpack.c.b16 %v1440, %v1438
    %v1475 = vpack.c.b16 %v1441, %v1439
    %v1476 = vpack.c.b16 %v1444, %v1442
    %v1477 = vpack.c.b16 %v1445, %v1443
    %1510 = vmatprep.subr.bf16.mxu0 %v1447
    %1511 = vmatpush1.bf16.msra.mxu0 %v1446
    %1512 = vmatprep.subr.bf16.mxu0 %v1449
    %1513 = vmatpush1.bf16.msra.mxu0 %v1448
    %1514 = vmatprep.subr.bf16.mxu0 %v1451
    %1515 = vmatpush1.bf16.msra.mxu0 %v1450
    %1516 = vmatprep.subr.bf16.mxu0 %v1453
    %1517 = vmatpush1.bf16.msra.mxu0 %v1452
    %1518 = vmatprep.subr.bf16.mxu0 %v1455
    %1519 = vmatpush1.bf16.msra.mxu0 %v1454
    %1520 = vmatprep.subr.bf16.mxu0 %v1457
    %1521 = vmatpush1.bf16.msra.mxu0 %v1456
    %1522 = vmatprep.subr.bf16.mxu0 %v1459
    %1523 = vmatpush1.bf16.msra.mxu0 %v1458
    %1524 = vmatprep.subr.bf16.mxu0 %v1461
    %1525 = vmatpush1.bf16.msra.mxu0 %v1460
    %1526 = vmatprep.subr.bf16.mxu0 %v1463
    %1527 = vmatpush1.bf16.msra.mxu0 %v1462
    %1528 = vmatprep.subr.bf16.mxu0 %v1465
    %1529 = vmatpush1.bf16.msra.mxu0 %v1464
    %1530 = vmatprep.subr.bf16.mxu0 %v1467
    %1531 = vmatpush1.bf16.msra.mxu0 %v1466
    %1532 = vmatprep.subr.bf16.mxu0 %v1469
    %1533 = vmatpush1.bf16.msra.mxu0 %v1468
    %1534 = vmatprep.subr.bf16.mxu0 %v1471
    %1535 = vmatpush1.bf16.msra.mxu0 %v1470
    %1536 = vmatprep.subr.bf16.mxu0 %v1473
    %1537 = vmatpush1.bf16.msra.mxu0 %v1472
    %1538 = vmatprep.subr.bf16.mxu0 %v1475
    %1539 = vmatpush1.bf16.msra.mxu0 %v1474
    %1540 = vmatprep.subr.bf16.mxu0 %v1477
    %1541 = vmatpush1.bf16.msra.mxu0 %v1476
    %1542 = vmatprep.mubr.bf16.mxu0 %v1316
    %1543 = vmatmul.mubr.bf16.gmra.mrb[0].mxu0 %v1315
    %v1544 = vpop.f32.mrb[0].mxu0
    %v1545 = vadd.f32 0.0, %v1544
    %v1546 = vpop.f32.mrb[0].mxu0
    %v1547 = vadd.f32 0.0, %v1546
    %v1548 = vpop.f32.mrb[0].mxu0
    %v1549 = vadd.f32 0.0, %v1548
    %v1550 = vpop.f32.mrb[0].mxu0
    %v1551 = vadd.f32 0.0, %v1550
    %1552 = vdwg.mxu0
    %v1553 = vadd.f32 %v1295, %v1545
    %v1554 = vadd.f32 %v1297, %v1547
    %v1555 = vadd.f32 %v1299, %v1549
    %v1556 = vadd.f32 %v1301, %v1551
    %v1557 = vadd.f32 %v1553, %v1555
    %v1558 = vrot.slane %v1557, 4
    %v1559 = vadd.f32 %v1557, %v1558
    %v1560 = vrot.slane %v1559, 2
    %v1561 = vadd.f32 %v1559, %v1560
    %v1562 = vrot.slane %v1561, 1
    %v1563 = vadd.f32 %v1561, %v1562
    %v1564 = vadd.f32 %v1554, %v1556
    %v1565 = vrot.slane %v1564, 4
    %v1566 = vadd.f32 %v1564, %v1565
    %v1567 = vrot.slane %v1566, 2
    %v1568 = vadd.f32 %v1566, %v1567
    %v1569 = vrot.slane %v1568, 1
    %v1570 = vadd.f32 %v1568, %v1569
    %1571 = vmatprep.subr.mxu0 %v563
    %1572 = vmatpush1.msra.mxu0 %v562
    %1573 = vmatprep.subr.mxu0 %v565
    %1574 = vmatpush1.msra.mxu0 %v564
    %1575 = vmatprep.subr.mxu0 %v567
    %1576 = vmatpush1.msra.mxu0 %v566
    %1577 = vmatprep.subr.mxu0 %v569
    %1578 = vmatpush1.msra.mxu0 %v568
    %1579 = vmatprep.subr.mxu0 %v571
    %1580 = vmatpush1.msra.mxu0 %v570
    %1581 = vmatprep.subr.mxu0 %v573
    %1582 = vmatpush1.msra.mxu0 %v572
    %1583 = vmatprep.subr.mxu0 %v575
    %1584 = vmatpush1.msra.mxu0 %v574
    %1585 = vmatprep.subr.mxu0 %v577
    %1586 = vmatpush1.msra.mxu0 %v576
    %1587 = vmatprep.subr.mxu0 %v579
    %1588 = vmatpush1.msra.mxu0 %v578
    %1589 = vmatprep.subr.mxu0 %v581
    %1590 = vmatpush1.msra.mxu0 %v580
    %1591 = vmatprep.subr.mxu0 %v583
    %1592 = vmatpush1.msra.mxu0 %v582
    %1593 = vmatprep.subr.mxu0 %v585
    %1594 = vmatpush1.msra.mxu0 %v584
    %1595 = vmatprep.subr.mxu0 %v587
    %1596 = vmatpush1.msra.mxu0 %v586
    %1597 = vmatprep.subr.mxu0 %v589
    %1598 = vmatpush1.msra.mxu0 %v588
    %1599 = vmatprep.subr.mxu0 %v591
    %1600 = vmatpush1.msra.mxu0 %v590
    %1601 = vmatprep.subr.mxu0 %v593
    %1602 = vmatpush1.msra.mxu0 %v592
    %1603 = vmatprep.subr.mxu0 %v595
    %1604 = vmatpush1.msra.mxu0 %v594
    %1605 = vmatprep.subr.mxu0 %v597
    %1606 = vmatpush1.msra.mxu0 %v596
    %1607 = vmatprep.subr.mxu0 %v599
    %1608 = vmatpush1.msra.mxu0 %v598
    %1609 = vmatprep.subr.mxu0 %v601
    %1610 = vmatpush1.msra.mxu0 %v600
    %1611 = vmatprep.subr.mxu0 %v603
    %1612 = vmatpush1.msra.mxu0 %v602
    %1613 = vmatprep.subr.mxu0 %v605
    %1614 = vmatpush1.msra.mxu0 %v604
    %1615 = vmatprep.subr.mxu0 %v607
    %1616 = vmatpush1.msra.mxu0 %v606
    %1617 = vmatprep.subr.mxu0 %v609
    %1618 = vmatpush1.msra.mxu0 %v608
    %1619 = vmatprep.subr.mxu0 %v611
    %1620 = vmatpush1.msra.mxu0 %v610
    %1621 = vmatprep.subr.mxu0 %v613
    %1622 = vmatpush1.msra.mxu0 %v612
    %1623 = vmatprep.subr.mxu0 %v615
    %1624 = vmatpush1.msra.mxu0 %v614
    %1625 = vmatprep.subr.mxu0 %v617
    %1626 = vmatpush1.msra.mxu0 %v616
    %1627 = vmatprep.subr.mxu0 %v619
    %1628 = vmatpush1.msra.mxu0 %v618
    %1629 = vmatprep.subr.mxu0 %v621
    %1630 = vmatpush1.msra.mxu0 %v620
    %1631 = vmatprep.subr.mxu0 %v623
    %1632 = vmatpush1.msra.mxu0 %v622
    %1633 = vmatprep.subr.mxu0 %v625
    %1634 = vmatpush1.msra.mxu0 %v624
    %1635 = vmatprep.mubr.f32.mxu0 %v1570
    %1636 = vmatmul.mubr.f32.gmra.mrb[0].mxu0 %v1563
    %v1637 = vpop.f32.mrb[0].mxu0
    %v1638 = vadd.f32 0.0, %v1637
    %v1639 = vpop.f32.mrb[0].mxu0
    %v1640 = vadd.f32 0.0, %v1639
    %1641 = vdwg.mxu0
    %v1642 = vlaneseq
    %v1643 = vshrl.u32 %v1642, 7
    %v1644 = vsub.s32 0, %v1643
    %v1645 = vrot.slane %v1638, %v1644
    %v1646 = vlaneseq
    %v1647 = vshrl.u32 %v1646, 7
    %v1648 = vsub.s32 0, %v1647
    %v1649 = vrot.slane %v1640, %v1648
    %v1650 = vsub.f32 %v1553, %v1645
    %v1651 = vsub.f32 %v1554, %v1649
    %v1652 = vsub.f32 %v1555, %v1645
    %v1653 = vsub.f32 %v1556, %v1649
    %v1654 = vmul.f32 %v1650, %v1650
    %v1655 = vmul.f32 %v1651, %v1651
    %v1656 = vmul.f32 %v1652, %v1652
    %v1657 = vmul.f32 %v1653, %v1653
    %v1658 = vadd.f32 %v1654, %v1656
    %v1659 = vrot.slane %v1658, 4
    %v1660 = vadd.f32 %v1658, %v1659
    %v1661 = vrot.slane %v1660, 2
    %v1662 = vadd.f32 %v1660, %v1661
    %v1663 = vrot.slane %v1662, 1
    %v1664 = vadd.f32 %v1662, %v1663
    %v1665 = vadd.f32 %v1655, %v1657
    %v1666 = vrot.slane %v1665, 4
    %v1667 = vadd.f32 %v1665, %v1666
    %v1668 = vrot.slane %v1667, 2
    %v1669 = vadd.f32 %v1667, %v1668
    %v1670 = vrot.slane %v1669, 1
    %v1671 = vadd.f32 %v1669, %v1670
    %1672 = vmatprep.subr.mxu0 %v563
    %1673 = vmatpush1.msra.mxu0 %v562
    %1674 = vmatprep.subr.mxu0 %v565
    %1675 = vmatpush1.msra.mxu0 %v564
    %1676 = vmatprep.subr.mxu0 %v567
    %1677 = vmatpush1.msra.mxu0 %v566
    %1678 = vmatprep.subr.mxu0 %v569
    %1679 = vmatpush1.msra.mxu0 %v568
    %1680 = vmatprep.subr.mxu0 %v571
    %1681 = vmatpush1.msra.mxu0 %v570
    %1682 = vmatprep.subr.mxu0 %v573
    %1683 = vmatpush1.msra.mxu0 %v572
    %1684 = vmatprep.subr.mxu0 %v575
    %1685 = vmatpush1.msra.mxu0 %v574
    %1686 = vmatprep.subr.mxu0 %v577
    %1687 = vmatpush1.msra.mxu0 %v576
    %1688 = vmatprep.subr.mxu0 %v579
    %1689 = vmatpush1.msra.mxu0 %v578
    %1690 = vmatprep.subr.mxu0 %v581
    %1691 = vmatpush1.msra.mxu0 %v580
    %1692 = vmatprep.subr.mxu0 %v583
    %1693 = vmatpush1.msra.mxu0 %v582
    %1694 = vmatprep.subr.mxu0 %v585
    %1695 = vmatpush1.msra.mxu0 %v584
    %1696 = vmatprep.subr.mxu0 %v587
    %1697 = vmatpush1.msra.mxu0 %v586
    %1698 = vmatprep.subr.mxu0 %v589
    %1699 = vmatpush1.msra.mxu0 %v588
    %1700 = vmatprep.subr.mxu0 %v591
    %1701 = vmatpush1.msra.mxu0 %v590
    %1702 = vmatprep.subr.mxu0 %v593
    %1703 = vmatpush1.msra.mxu0 %v592
    %1704 = vmatprep.subr.mxu0 %v595
    %1705 = vmatpush1.msra.mxu0 %v594
    %1706 = vmatprep.subr.mxu0 %v597
    %1707 = vmatpush1.msra.mxu0 %v596
    %1708 = vmatprep.subr.mxu0 %v599
    %1709 = vmatpush1.msra.mxu0 %v598
    %1710 = vmatprep.subr.mxu0 %v601
    %1711 = vmatpush1.msra.mxu0 %v600
    %1712 = vmatprep.subr.mxu0 %v603
    %1713 = vmatpush1.msra.mxu0 %v602
    %1714 = vmatprep.subr.mxu0 %v605
    %1715 = vmatpush1.msra.mxu0 %v604
    %1716 = vmatprep.subr.mxu0 %v607
    %1717 = vmatpush1.msra.mxu0 %v606
    %1718 = vmatprep.subr.mxu0 %v609
    %1719 = vmatpush1.msra.mxu0 %v608
    %1720 = vmatprep.subr.mxu0 %v611
    %1721 = vmatpush1.msra.mxu0 %v610
    %1722 = vmatprep.subr.mxu0 %v613
    %1723 = vmatpush1.msra.mxu0 %v612
    %1724 = vmatprep.subr.mxu0 %v615
    %1725 = vmatpush1.msra.mxu0 %v614
    %1726 = vmatprep.subr.mxu0 %v617
    %1727 = vmatpush1.msra.mxu0 %v616
    %1728 = vmatprep.subr.mxu0 %v619
    %1729 = vmatpush1.msra.mxu0 %v618
    %1730 = vmatprep.subr.mxu0 %v621
    %1731 = vmatpush1.msra.mxu0 %v620
    %1732 = vmatprep.subr.mxu0 %v623
    %1733 = vmatpush1.msra.mxu0 %v622
    %1734 = vmatprep.subr.mxu0 %v625
    %1735 = vmatpush1.msra.mxu0 %v624
    %1736 = vmatprep.mubr.f32.mxu0 %v1671
    %1737 = vmatmul.mubr.f32.gmra.mrb[0].mxu0 %v1664
    %v1738 = vpop.f32.mrb[0].mxu0
    %v1739 = vadd.f32 1e-05, %v1738
    %v1740 = vpop.f32.mrb[0].mxu0
    %v1741 = vadd.f32 1e-05, %v1740
    %1742 = vdwg.mxu0
    %v1743 = vrsqrt.pop %v1739
    %v1744 = vrsqrt.pop %v1741
    %v1745 = vmul.f32 %v1743, 0.25
    %v1746 = vmul.f32 %v1744, 0.25
    %v1747 = vlaneseq
    %v1748 = vshrl.u32 %v1747, 7
    %v1749 = vsub.s32 0, %v1748
    %v1750 = vrot.slane %v1745, %v1749
    %v1751 = vlaneseq
    %v1752 = vshrl.u32 %v1751, 7
    %v1753 = vsub.s32 0, %v1752
    %v1754 = vrot.slane %v1746, %v1753
    %v1755 = vmul.f32 %v1650, %v1750
    %v1756 = vmul.f32 %v1651, %v1754
    %v1757 = vmul.f32 %v1652, %v1750
    %v1758 = vmul.f32 %v1653, %v1754
    %v1759 = vmax.f32 %v1755, 0.0
    %v1760 = vmax.f32 %v1756, 0.0
    %v1761 = vmax.f32 %v1757, 0.0
    %v1762 = vmax.f32 %v1758, 0.0
    %v1763 = vpack.c.bf16 %v1761, %v1759
    %v1764 = vpack.c.bf16 %v1762, %v1760
    %v1765 = vld [vmem:[%s4] sm:$0xf]
    %v1766 = vld [vmem:[%s4 + $0x4] sm:$0xf]
    %v1767 = vld [vmem:[%s4 + $0x8] sm:$0xf]
    %v1768 = vld [vmem:[%s4 + $0xc] sm:$0xf]
    %v1769 = vld [vmem:[%s4 + $0x10] sm:$0xf]
    %v1770 = vld [vmem:[%s4 + $0x14] sm:$0xf]
    %v1771 = vld [vmem:[%s4 + $0x18] sm:$0xf]
    %v1772 = vld [vmem:[%s4 + $0x1c] sm:$0xf]
    %v1773 = vld [vmem:[%s4 + $0x20] sm:$0xf]
    %v1774 = vld [vmem:[%s4 + $0x24] sm:$0xf]
    %v1775 = vld [vmem:[%s4 + $0x28] sm:$0xf]
    %v1776 = vld [vmem:[%s4 + $0x2c] sm:$0xf]
    %v1777 = vld [vmem:[%s4 + $0x30] sm:$0xf]
    %v1778 = vld [vmem:[%s4 + $0x34] sm:$0xf]
    %v1779 = vld [vmem:[%s4 + $0x38] sm:$0xf]
    %v1780 = vld [vmem:[%s4 + $0x3c] sm:$0xf]
    %v1781 = vld [vmem:[%s4 + $0x40] sm:$0xf]
    %v1782 = vld [vmem:[%s4 + $0x44] sm:$0xf]
    %v1783 = vld [vmem:[%s4 + $0x48] sm:$0xf]
    %v1784 = vld [vmem:[%s4 + $0x4c] sm:$0xf]
    %v1785 = vld [vmem:[%s4 + $0x50] sm:$0xf]
    %v1786 = vld [vmem:[%s4 + $0x54] sm:$0xf]
    %v1787 = vld [vmem:[%s4 + $0x58] sm:$0xf]
    %v1788 = vld [vmem:[%s4 + $0x5c] sm:$0xf]
    %v1789 = vld [vmem:[%s4 + $0x60] sm:$0xf]
    %v1790 = vld [vmem:[%s4 + $0x64] sm:$0xf]
    %v1791 = vld [vmem:[%s4 + $0x68] sm:$0xf]
    %v1792 = vld [vmem:[%s4 + $0x6c] sm:$0xf]
    %v1793 = vld [vmem:[%s4 + $0x70] sm:$0xf]
    %v1794 = vld [vmem:[%s4 + $0x74] sm:$0xf]
    %v1795 = vld [vmem:[%s4 + $0x78] sm:$0xf]
    %v1796 = vld [vmem:[%s4 + $0x7c] sm:$0xf]
    %v1829 = vunpack.c.l.b16 %v1765
    %v1830 = vunpack.c.l.b16 %v1766
    %v1831 = vunpack.c.l.b16 %v1767
    %v1832 = vunpack.c.l.b16 %v1768
    %v1833 = vunpack.c.l.b16 %v1769
    %v1834 = vunpack.c.l.b16 %v1770
    %v1835 = vunpack.c.l.b16 %v1771
    %v1836 = vunpack.c.l.b16 %v1772
    %v1837 = vunpack.c.l.b16 %v1773
    %v1838 = vunpack.c.l.b16 %v1774
    %v1839 = vunpack.c.l.b16 %v1775
    %v1840 = vunpack.c.l.b16 %v1776
    %v1841 = vunpack.c.l.b16 %v1777
    %v1842 = vunpack.c.l.b16 %v1778
    %v1843 = vunpack.c.l.b16 %v1779
    %v1844 = vunpack.c.l.b16 %v1780
    %v1845 = vunpack.c.l.b16 %v1781
    %v1846 = vunpack.c.l.b16 %v1782
    %v1847 = vunpack.c.l.b16 %v1783
    %v1848 = vunpack.c.l.b16 %v1784
    %v1849 = vunpack.c.l.b16 %v1785
    %v1850 = vunpack.c.l.b16 %v1786
    %v1851 = vunpack.c.l.b16 %v1787
    %v1852 = vunpack.c.l.b16 %v1788
    %v1853 = vunpack.c.l.b16 %v1789
    %v1854 = vunpack.c.l.b16 %v1790
    %v1855 = vunpack.c.l.b16 %v1791
    %v1856 = vunpack.c.l.b16 %v1792
    %v1857 = vunpack.c.l.b16 %v1793
    %v1858 = vunpack.c.l.b16 %v1794
    %v1859 = vunpack.c.l.b16 %v1795
    %v1860 = vunpack.c.l.b16 %v1796
    %v1861 = vpack.c.b16 %v1830, %v1829
    %v1862 = vpack.c.b16 %v1832, %v1831
    %v1863 = vpack.c.b16 %v1834, %v1833
    %v1864 = vpack.c.b16 %v1836, %v1835
    %v1865 = vpack.c.b16 %v1838, %v1837
    %v1866 = vpack.c.b16 %v1840, %v1839
    %v1867 = vpack.c.b16 %v1842, %v1841
    %v1868 = vpack.c.b16 %v1844, %v1843
    %v1869 = vpack.c.b16 %v1846, %v1845
    %v1870 = vpack.c.b16 %v1848, %v1847
    %v1871 = vpack.c.b16 %v1850, %v1849
    %v1872 = vpack.c.b16 %v1852, %v1851
    %v1873 = vpack.c.b16 %v1854, %v1853
    %v1874 = vpack.c.b16 %v1856, %v1855
    %v1875 = vpack.c.b16 %v1858, %v1857
    %v1876 = vpack.c.b16 %v1860, %v1859
    %1893 = vmatprep.subr.bf16.mxu0 0
    %1894 = vmatpush1.bf16.msra.mxu0 %v1861
    %1895 = vmatprep.subr.bf16.mxu0 0
    %1896 = vmatpush1.bf16.msra.mxu0 %v1862
    %1897 = vmatprep.subr.bf16.mxu0 0
    %1898 = vmatpush1.bf16.msra.mxu0 %v1863
    %1899 = vmatprep.subr.bf16.mxu0 0
    %1900 = vmatpush1.bf16.msra.mxu0 %v1864
    %1901 = vmatprep.subr.bf16.mxu0 0
    %1902 = vmatpush1.bf16.msra.mxu0 %v1865
    %1903 = vmatprep.subr.bf16.mxu0 0
    %1904 = vmatpush1.bf16.msra.mxu0 %v1866
    %1905 = vmatprep.subr.bf16.mxu0 0
    %1906 = vmatpush1.bf16.msra.mxu0 %v1867
    %1907 = vmatprep.subr.bf16.mxu0 0
    %1908 = vmatpush1.bf16.msra.mxu0 %v1868
    %1909 = vmatprep.subr.bf16.mxu0 0
    %1910 = vmatpush1.bf16.msra.mxu0 %v1869
    %1911 = vmatprep.subr.bf16.mxu0 0
    %1912 = vmatpush1.bf16.msra.mxu0 %v1870
    %1913 = vmatprep.subr.bf16.mxu0 0
    %1914 = vmatpush1.bf16.msra.mxu0 %v1871
    %1915 = vmatprep.subr.bf16.mxu0 0
    %1916 = vmatpush1.bf16.msra.mxu0 %v1872
    %1917 = vmatprep.subr.bf16.mxu0 0
    %1918 = vmatpush1.bf16.msra.mxu0 %v1873
    %1919 = vmatprep.subr.bf16.mxu0 0
    %1920 = vmatpush1.bf16.msra.mxu0 %v1874
    %1921 = vmatprep.subr.bf16.mxu0 0
    %1922 = vmatpush1.bf16.msra.mxu0 %v1875
    %1923 = vmatprep.subr.bf16.mxu0 0
    %1924 = vmatpush1.bf16.msra.mxu0 %v1876
    %1925 = vmatprep.mubr.bf16.mxu0 %v1764
    %1926 = vmatmul.mubr.bf16.gmra.mrb[0].mxu0 %v1763
    %v1927 = vpop.f32.mrb[0].mxu0
    %v1928 = vadd.f32 0.0, %v1927
    %v1929 = vpop.f32.mrb[0].mxu0
    %v1930 = vpop.f32.mrb[0].mxu0
    %v1931 = vadd.f32 0.0, %v1930
    %v1932 = vpop.f32.mrb[0].mxu0
    %1933 = vdwg.mxu0
    %vm1934 = vcmask 523264
    %1935 = vst.msk [vmem:[#allocation8] sm:$0xff] %vm1934, %v1928
    %1936 = vst.msk [vmem:[#allocation8 + $0x8] sm:$0xff] %vm1934, %v1931
    // Predicated region
    $region34: #{tpu_custom_call.1} parent=1 // pred_check
      _
    $region35: #{tpu_custom_call.1} parent=1 // pred_check_branch
      %1938 = sbr.rel (0) target = $region37
    $region36: #{tpu_custom_call.1} parent=1 // pred_region
      %s1940 = ssub.s32 256, 256
      %1941 = vsyncadd [#allocation4], %s1940
      %s1942 = sshll.u32 [#allocation8], 4
      %s1943 = int_to_ptr.vmem [resolvable:$true] %s1942
      %1948 = dma.vmem_to_hbm [thread:$0]  %s1943, 256, %s5, [#allocation4], 128, 128, 8
    $region37: #{tpu_custom_call.1} parent=1 // pred_fallthru
      _
    // Predicated region
    $region38: #{tpu_custom_call.1} parent=1 // pred_check
      _
    $region39: #{tpu_custom_call.1} parent=1 // pred_check_branch
      %1950 = sbr.rel (0) target = $region41
    $region40: #{tpu_custom_call.1} parent=1 // pred_region
      %1951 = dma.done [#allocation4], 256
    $region41: #{tpu_custom_call.1} parent=1 // pred_fallthru
      _
    %1952 = vsyncpa [#allocation3], 1
    %1953 = vsyncpa [#allocation6], 1
    %1954 = vsyncpa [#allocation4], 1

</llo_original>
